<compile_context>
chip_gen: v5e
topology: v5e:2x2
jax: 0.10.0
libtpu: 0.0.40
codegen_flags: <defaults>
</compile_context>

<pallas_src>
import functools
import math

import jax
import jax.numpy as jnp
from jax import lax
from jax.experimental import pallas as pl
from jax.experimental.pallas import tpu as pltpu

EPS = 1e-7        # Hyperboloid.eps[float32]
MIN_NORM = 1e-15  # Hyperboloid.min_norm
MAX_NORM = 1e6    # Hyperboloid.max_norm

LANE = 128
SUBLANE = 8
# Scoped-VMEM cap: well under v7x's 64 MiB physical VMEM, far above the blocks used.
_VMEM_LIMIT = 48 * 1024 * 1024


def _round_up(v, m):
    return ((v + m - 1) // m) * m


# ---------------------------------------------------------------------------
# Hyperboloid manifold math.
#   * `tmask` is the hoisted column-0 (time-coordinate) mask, built ONCE per tile
#     shape per kernel invocation (JAX does not CSE iota/broadcast).
#   * `approx=True` routes 1/x through the EUP (pl.reciprocal) -- used inside the
#     kernels; the plain-JAX reference path uses approx=False (exact divides).
# ---------------------------------------------------------------------------
def _time_mask(shape):
    return lax.broadcasted_iota(jnp.int32, shape, len(shape) - 1) == 0


def _recip(x, approx):
    return pl.reciprocal(x, approx=True) if approx else 1.0 / x


def _cosh_sinh(t, approx):
    # One exp + one (EUP) reciprocal instead of two exps per cosh and per sinh.
    e = jnp.exp(t)
    einv = _recip(e, approx)
    return 0.5 * (e + einv), 0.5 * (e - einv)


def _spatial_sqnorm(x, tmask):
    xs = jnp.where(tmask, 0.0, x)
    return jnp.sum(xs * xs, axis=-1, keepdims=True)


def _time_coord(x, tmask):
    return jnp.sum(jnp.where(tmask, x, 0.0), axis=-1, keepdims=True)


def _arcosh(z):
    return jnp.log(z + jnp.sqrt(jnp.maximum(z * z - 1.0, EPS)))


def hyp_proj(x, c, tmask):
    K = 1.0 / c
    time = jnp.sqrt(jnp.maximum(K + _spatial_sqnorm(x, tmask), EPS))
    return jnp.where(tmask, time, x)


def expmap0(u, c, tmask, approx):
    K = 1.0 / c
    sqrtK = K ** 0.5
    sqn = jnp.maximum(_spatial_sqnorm(u, tmask), MIN_NORM * MIN_NORM)
    inv_norm = lax.rsqrt(sqn)          # rsqrt instead of sqrt + divide
    x_norm = sqn * inv_norm            # == sqrt(sqn)
    theta = x_norm * (1.0 / sqrtK)
    ch, sh = _cosh_sinh(theta, approx)
    res = jnp.where(tmask, sqrtK * ch, (sqrtK * sh * inv_norm) * u)
    return hyp_proj(res, c, tmask)


def logmap0(x, c, tmask, approx):
    K = 1.0 / c
    sqrtK = K ** 0.5
    sqn = jnp.maximum(_spatial_sqnorm(x, tmask), MIN_NORM * MIN_NORM)
    inv_norm = lax.rsqrt(sqn)
    theta = jnp.maximum(_time_coord(x, tmask) * (1.0 / sqrtK), 1.0 + EPS)
    return jnp.where(tmask, 0.0, (sqrtK * _arcosh(theta) * inv_norm) * x)


def proj_tan(u, x, c, tmask, approx):
    ux = jnp.sum(jnp.where(tmask, 0.0, x * u), axis=-1, keepdims=True)
    x0 = jnp.maximum(_time_coord(x, tmask), MIN_NORM)
    return jnp.where(tmask, ux * _recip(x0, approx), u)


def expmap(u, x, c, tmask, approx):
    K = 1.0 / c
    sqrtK = K ** 0.5
    sqdot = jnp.sum(u * u, axis=-1, keepdims=True) - 2.0 * _time_coord(u, tmask) ** 2
    normu = jnp.minimum(jnp.sqrt(jnp.maximum(sqdot, EPS)), MAX_NORM)
    theta = jnp.maximum(normu * (1.0 / sqrtK), MIN_NORM)
    ch, sh = _cosh_sinh(theta, approx)
    res = ch * x + (sh * _recip(theta, approx)) * u
    return hyp_proj(res, c, tmask)


def ptransp0(x, u, c, tmask, approx):
    K = 1.0 / c
    sqrtK = K ** 0.5
    x0 = _time_coord(x, tmask)
    sqn = jnp.maximum(_spatial_sqnorm(x, tmask), MIN_NORM * MIN_NORM)
    inv_norm = lax.rsqrt(sqn)
    y_norm = sqn * inv_norm
    y_normalized = jnp.where(tmask, 0.0, x) * inv_norm
    v = jnp.where(tmask, -y_norm, (sqrtK - x0) * y_normalized)
    alpha = jnp.sum(jnp.where(tmask, 0.0, y_normalized * u),
                    axis=-1, keepdims=True) * (1.0 / sqrtK)
    res = u - alpha * v
    return proj_tan(res, x, c, tmask, approx)


# ---------------------------------------------------------------------------
# Layer math used inside the kernels (eval mode; bias precomputed in tangent space)
# ---------------------------------------------------------------------------
def hyp_linear_tan_bias(x, w_t, bias_t, c, tmask_in, tmask_out, approx):
    """HypLinear with bias given as proj_tan0(b); the constant expmap0->logmap0
    round trip of mobius_add on the bias is skipped (exact)."""
    u = logmap0(x, c, tmask_in, approx)
    mu = jnp.dot(u, w_t, preferred_element_type=jnp.float32)
    res = expmap0(mu, c, tmask_out, approx)            # ends with proj
    v = ptransp0(res, bias_t, c, tmask_out, approx)    # mobius_add(res, hyp_bias)
    return expmap(v, res, c, tmask_out, approx)        # ends with proj


def hyp_linear_tan_in_tan_bias(u, w_t, bias_t, c, tmask_out, approx):
    """HypLinear whose input is already the origin-tangent vector (logmap0 done
    upstream in the aggregation finalize) and whose bias is a tangent vector."""
    mu = jnp.dot(u, w_t, preferred_element_type=jnp.float32)
    res = expmap0(mu, c, tmask_out, approx)
    v = ptransp0(res, bias_t, c, tmask_out, approx)
    return expmap(v, res, c, tmask_out, approx)


# ---------------------------------------------------------------------------
# Pallas kernels
# ---------------------------------------------------------------------------
def _linear1_kernel(x_ref, w1t_ref, b1t_ref, t1_ref, *, c, approx):
    """Per-row-tile HypLinear(layer 1); emits tangent features (HypAgg1's logmap0)."""
    tmask_in = _time_mask(x_ref.shape)
    tmask_h = _time_mask(t1_ref.shape)
    h = hyp_linear_tan_bias(x_ref[...], w1t_ref[...], b1t_ref[...],
                            c, tmask_in, tmask_h, approx)
    t1_ref[...] = logmap0(h, c, tmask_h, approx).astype(t1_ref.dtype)


def _linear2_kernel(u_ref, w2t_ref, b2t_ref, t2_ref, *, c, approx):
    """Per-row-tile HypLinear(layer 2).  Input is the origin-tangent vector produced
    by the fused HypAgg1 finalize (logmap0 already applied there); emits the tangent
    features feeding HypAgg2."""
    tmask_o = _time_mask(t2_ref.shape)
    u = u_ref[...].astype(jnp.float32)
    h = hyp_linear_tan_in_tan_bias(u, w2t_ref[...], b2t_ref[...],
                                   c, tmask_o, approx)
    t2_ref[...] = logmap0(h, c, tmask_o, approx).astype(t2_ref.dtype)


def _agg_kernel(adj_ref, t_ref, out_ref, acc_ref, *, c, approx, mode):
    """HypAgg: support = adj @ xt accumulated over k tiles (bf16 MXU, f32 acc).

    Finalize (pure elementwise, runs while the accumulator tile is hot in VMEM):
      mode == "act_tangent": proj(expmap0(support)) -> HypAct (relu in tangent
        space) -> logmap0, i.e. the tangent input of HypLinear(layer 2).
      mode == "tangent":     proj(expmap0(support)) -> the network's final
        logmap0 / proj_tan0.
    """
    k = pl.program_id(1)

    @pl.when(k == 0)
    def _():
        acc_ref[...] = jnp.zeros_like(acc_ref)

    acc_ref[...] += jnp.dot(adj_ref[...], t_ref[...],
                            preferred_element_type=jnp.float32)

    @pl.when(k == pl.num_programs(1) - 1)
    def _():
        tmask = _time_mask(acc_ref.shape)
        h = expmap0(acc_ref[...], c, tmask, approx)       # HypAgg output (proj incl.)
        if mode == "act_tangent":
            xt = jnp.maximum(logmap0(h, c, tmask, approx), 0.0)   # HypAct (relu)
            # proj_tan0 is an exact no-op (time column already zero)
            h = expmap0(xt, c, tmask, approx)
            h = logmap0(h, c, tmask, approx)              # leading logmap0 of linear2
        else:  # "tangent"
            h = logmap0(h, c, tmask, approx)              # proj_tan0 no-op afterwards
        out_ref[...] = h.astype(out_ref.dtype)


def _pool_softmax_kernel(pool_ref, ht_ref, out_ref, acc_ref, *, n_valid_cols):
    """global_mean_pool (k-accumulated over node tiles) + masked log_softmax."""
    k = pl.program_id(0)

    @pl.when(k == 0)
    def _():
        acc_ref[...] = jnp.zeros_like(acc_ref)

    acc_ref[...] += jnp.dot(pool_ref[...], ht_ref[...],
                            preferred_element_type=jnp.float32)

    @pl.when(k == pl.num_programs(0) - 1)
    def _():
        z = acc_ref[...]
        col = lax.broadcasted_iota(jnp.int32, z.shape, 1)
        zm = jnp.where(col < n_valid_cols, z, jnp.float32(-1e30))  # mask lane padding
        m = jnp.max(zm, axis=-1, keepdims=True)
        e = jnp.exp(zm - m)
        lse = jnp.log(jnp.sum(e, axis=-1, keepdims=True))
        out_ref[...] = (z - m) - lse


# ---------------------------------------------------------------------------
# Wrapper: padding, tiling, and the five pallas_calls
# ---------------------------------------------------------------------------
def hgcn_pyg_forward(x, adj, pool, w1, b1, w2, b2, c, *,
                     tm=256, tk=512, min_n_pad=0, approx=True):
    """HGCN_pyg forward (eval mode).

    x:[N,Din] hyperboloid features (time coord in col 0); adj:[N,N] GCN-normalized
    dense adjacency; pool:[G,N] mean-pool matrix; w*: [out,in] (torch); b*: [out].

    tm/tk: node-row tile and contraction tile.  Defaults sized for v7x (64 MiB VMEM);
    on v5e prefer a smaller tm (e.g. 256 -> 128/256) to keep DMA exposure low.
    """
    c = float(c)
    N, din = x.shape
    hidden = w1.shape[0]
    c_out = w2.shape[0]
    G = pool.shape[0]

    assert tm % SUBLANE == 0 and tk % LANE == 0, "tm%8==0 and tk%128==0 required"

    # Pad feature dims to full 128-lane width, nodes to a multiple of the tiles,
    # graphs to a sublane multiple.  Padded rows/cols are exact zeros and provably
    # do not affect real rows (zero adj rows/cols, zero pool cols, zero weights).
    din_p = _round_up(max(din, LANE), LANE)
    hid_p = _round_up(max(hidden, LANE), LANE)
    out_p = _round_up(max(c_out, LANE), LANE)
    g_p = _round_up(max(G, SUBLANE), SUBLANE)
    step = tm * tk // math.gcd(tm, tk)
    n_p = _round_up(max(N, min_n_pad, 1), step)
    n_i, n_k = n_p // tm, n_p // tk

    f32 = jnp.float32
    bf16 = jnp.bfloat16
    x_p = jnp.zeros((n_p, din_p), f32).at[:N, :din].set(jnp.asarray(x, f32))
    adj_p = (jnp.zeros((n_p, n_p), f32).at[:N, :N].set(jnp.asarray(adj, f32))
             .astype(bf16))                               # bf16 halves HBM traffic
    pool_p = (jnp.zeros((g_p, n_p), f32).at[:G, :N].set(jnp.asarray(pool, f32))
              .astype(bf16))

    w1t_p = jnp.zeros((din_p, hid_p), f32).at[:din, :hidden].set(jnp.asarray(w1, f32).T)
    w2t_p = jnp.zeros((hid_p, out_p), f32).at[:hidden, :c_out].set(jnp.asarray(w2, f32).T)
    # Hyperbolic bias precomputed as a tangent vector at the origin: proj_tan0(b).
    b1t = jnp.asarray(b1, f32).at[0].set(0.0)
    b2t = jnp.asarray(b2, f32).at[0].set(0.0)
    b1t_p = jnp.zeros((1, hid_p), f32).at[0, :hidden].set(b1t)
    b2t_p = jnp.zeros((1, out_p), f32).at[0, :c_out].set(b2t)

    cparams_row = pltpu.CompilerParams(
        dimension_semantics=("parallel",), vmem_limit_bytes=_VMEM_LIMIT)
    cparams_agg = pltpu.CompilerParams(
        dimension_semantics=("parallel", "arbitrary"), vmem_limit_bytes=_VMEM_LIMIT)
    cparams_pool = pltpu.CompilerParams(
        dimension_semantics=("arbitrary",), vmem_limit_bytes=_VMEM_LIMIT)

    # ---- Stage 1: HypLinear(layer 1) per row tile -> tangent features t1 (bf16)
    t1 = pl.pallas_call(
        functools.partial(_linear1_kernel, c=c, approx=approx),
        out_shape=jax.ShapeDtypeStruct((n_p, hid_p), bf16),
        grid_spec=pltpu.PrefetchScalarGridSpec(
            num_scalar_prefetch=0,
            grid=(n_i,),
            in_specs=[
                pl.BlockSpec((tm, din_p), lambda i: (i, 0)),
                pl.BlockSpec((din_p, hid_p), lambda i: (0, 0)),   # resident weights
                pl.BlockSpec((1, hid_p), lambda i: (0, 0)),       # resident bias
            ],
            out_specs=pl.BlockSpec((tm, hid_p), lambda i: (i, 0)),
        ),
        compiler_params=cparams_row,
    )(x_p, w1t_p, b1t_p)

    def agg_call(t_arr, feat_p, out_dtype, mode):
        return pl.pallas_call(
            functools.partial(_agg_kernel, c=c, approx=approx, mode=mode),
            out_shape=jax.ShapeDtypeStruct((n_p, feat_p), out_dtype),
            grid_spec=pltpu.PrefetchScalarGridSpec(
                num_scalar_prefetch=0,
                grid=(n_i, n_k),
                in_specs=[
                    pl.BlockSpec((tm, tk), lambda i, k: (i, k)),       # adj tile (bf16)
                    pl.BlockSpec((tk, feat_p), lambda i, k: (k, 0)),   # tangent feats
                ],
                out_specs=pl.BlockSpec((tm, feat_p), lambda i, k: (i, 0)),
                scratch_shapes=[pltpu.VMEM((tm, feat_p), jnp.float32)],
            ),
            compiler_params=cparams_agg,
        )(adj_p, t_arr)

    # ---- Stage 2: HypAgg(layer 1) fused with HypAct + leading logmap0 of layer 2
    #      -> tangent input of HypLinear(layer 2), stored bf16 (half the HBM of the
    #      previous f32 hyperboloid-point intermediate).
    u2 = agg_call(t1, hid_p, bf16, mode="act_tangent")

    # ---- Stage 3: HypLinear(layer 2) per row tile -> tangent features t2 (bf16)
    # (F.dropout(p=0.5, training=False) between HypAct and hconv2 is the identity.)
    t2 = pl.pallas_call(
        functools.partial(_linear2_kernel, c=c, approx=approx),
        out_shape=jax.ShapeDtypeStruct((n_p, out_p), bf16),
        grid_spec=pltpu.PrefetchScalarGridSpec(
            num_scalar_prefetch=0,
            grid=(n_i,),
            in_specs=[
                pl.BlockSpec((tm, hid_p), lambda i: (i, 0)),
                pl.BlockSpec((hid_p, out_p), lambda i: (0, 0)),   # resident weights
                pl.BlockSpec((1, out_p), lambda i: (0, 0)),       # resident bias
            ],
            out_specs=pl.BlockSpec((tm, out_p), lambda i: (i, 0)),
        ),
        compiler_params=cparams_row,
    )(u2, w2t_p, b2t_p)

    # ---- Stage 4: HypAgg(layer 2) + final logmap0/proj_tan0 -> ht (bf16)
    ht = agg_call(t2, out_p, bf16, mode="tangent")

    # ---- Stage 5: global mean pool (k-accumulated over node tiles) + log_softmax
    # TODO(synk): for genuinely sparse adjacencies, replace the dense agg grid with a
    # block-sparse k list via PrefetchScalarGridSpec scalar prefetch (skip zero blocks).
    out = pl.pallas_call(
        functools.partial(_pool_softmax_kernel, n_valid_cols=c_out),
        out_shape=jax.ShapeDtypeStruct((g_p, out_p), jnp.float32),
        grid_spec=pltpu.PrefetchScalarGridSpec(
            num_scalar_prefetch=0,
            grid=(n_k,),
            in_specs=[
                pl.BlockSpec((g_p, tk), lambda k: (0, k)),
                pl.BlockSpec((tk, out_p), lambda k: (k, 0)),
            ],
            out_specs=pl.BlockSpec((g_p, out_p), lambda k: (0, 0)),
            scratch_shapes=[pltpu.VMEM((g_p, out_p), jnp.float32)],
        ),
        compiler_params=cparams_pool,
    )(pool_p, ht)

    return out[:G, :c_out]


# ---------------------------------------------------------------------------
# Plain-JAX reference: literal HypLinear/HypAgg/HypAct composition, full f32,
# exact reciprocals, explicit hyperbolic-bias round trip (faithful to the module).
# ---------------------------------------------------------------------------
def hgcn_reference(x, adj, pool, w1, b1, w2, b2, c):
    c = float(c)
    adj = jnp.asarray(adj, jnp.float32)

    def lin(h, w, b):
        tin = _time_mask(h.shape)
        u = logmap0(h, c, tin, False)
        mu = u @ jnp.asarray(w, jnp.float32).T
        tout = _time_mask(mu.shape)
        res = expmap0(mu, c, tout, False)
        bt = jnp.asarray(b, jnp.float32).reshape(1, -1)
        tb = _time_mask(bt.shape)
        bias_t = jnp.where(tb, 0.0, bt)                      # proj_tan0(bias)
        hyp_bias = expmap0(bias_t, c, tb, False)             # proj included
        ub = logmap0(hyp_bias, c, tb, False)                 # mobius_add
        v = ptransp0(res, ub, c, tout, False)
        res = expmap(v, res, c, tout, False)
        return hyp_proj(res, c, tout)

    def agg(h):
        t = _time_mask(h.shape)
        xt = logmap0(h, c, t, False)
        return expmap0(adj @ xt, c, t, False)

    def act(h):
        t = _time_mask(h.shape)
        xt = jnp.maximum(logmap0(h, c, t, False), 0.0)
        return expmap0(jnp.where(t, 0.0, xt), c, t, False)

    h = agg(lin(jnp.asarray(x, jnp.float32), w1, b1))   # hconv1
    h = act(h)                                          # hyp_act (dropout = identity)
    h = agg(lin(h, w2, b2))                             # hconv2
    t = _time_mask(h.shape)
    ht = jnp.where(t, 0.0, logmap0(h, c, t, False))     # logmap0 + proj_tan0
    pooled = jnp.asarray(pool, jnp.float32) @ ht        # global_mean_pool
    return jax.nn.log_softmax(pooled, axis=-1)


# ---------------------------------------------------------------------------
# Plain-JAX glue: edge_index -> GCN-normalized adjacency, batch -> mean-pool matrix
# ---------------------------------------------------------------------------
def build_gcn_adj(edge_index, num_nodes):
    src, dst = edge_index[0], edge_index[1]
    a = jnp.zeros((num_nodes, num_nodes), jnp.float32).at[dst, src].add(1.0)
    a = a + jnp.eye(num_nodes, dtype=jnp.float32)            # self-loops
    deg = jnp.sum(a, axis=1)
    d_inv_sqrt = 1.0 / jnp.sqrt(jnp.maximum(deg, 1e-12))
    return d_inv_sqrt[:, None] * a * d_inv_sqrt[None, :]     # D^-1/2 (A+I) D^-1/2


def build_mean_pool(batch, num_graphs, num_nodes):
    p = jnp.zeros((num_graphs, num_nodes), jnp.float32)
    p = p.at[batch, jnp.arange(num_nodes)].set(1.0)
    counts = jnp.sum(p, axis=1, keepdims=True)
    return p / jnp.maximum(counts, 1.0)


# ---------------------------------------------------------------------------
if __name__ == "__main__":
    c = 1.0
    N = 8               # nodes
    channel_in = 4      # includes the hyperboloid time coordinate (column 0)
    hidden = 32
    channel_out = 4
    num_graphs = 2

    key = jax.random.PRNGKey(0)
    k_x, k_w1, k_b1, k_w2, k_b2 = jax.random.split(key, 5)

    # Node features on the hyperboloid: random spatial part, time coord chosen so
    # that <x, x>_L = -1/c (i.e. proj() of the raw features).
    spatial = 0.5 * jax.random.normal(k_x, (N, channel_in), jnp.float32)
    spatial = spatial.at[:, 0].set(0.0)
    time = jnp.sqrt(1.0 / c + jnp.sum(spatial[:, 1:] ** 2, axis=1))
    x = spatial.at[:, 0].set(time)

    # Two undirected 4-node ring graphs.
    edges = []
    for base in (0, 4):
        for i in range(4):
            a, b = base + i, base + (i + 1) % 4
            edges.append((a, b))
            edges.append((b, a))
    edge_index = jnp.asarray(edges, jnp.int32).T            # [2, E]
    batch = jnp.asarray([0, 0, 0, 0, 1, 1, 1, 1], jnp.int32)

    # Deterministic parameters (torch layout: weight [out, in], bias [out]).
    def xavier(k, shape, gain=2.0 ** 0.5):
        fan_out, fan_in = shape
        lim = gain * (6.0 / (fan_in + fan_out)) ** 0.5
        return jax.random.uniform(k, shape, jnp.float32, -lim, lim)

    w1 = xavier(k_w1, (hidden, channel_in))
    b1 = 0.1 * jax.random.normal(k_b1, (hidden,), jnp.float32)
    w2 = xavier(k_w2, (channel_out, hidden))
    b2 = 0.1 * jax.random.normal(k_b2, (channel_out,), jnp.float32)

    adj = build_gcn_adj(edge_index, N)
    pool = build_mean_pool(batch, num_graphs, N)

    # Small tiles for the toy graph; min_n_pad=256 forces a 4x2 (rows x k) grid so
    # the k-accumulator / pl.when pipeline is genuinely exercised.
    out = hgcn_pyg_forward(x, adj, pool, w1, b1, w2, b2, c,
                           tm=64, tk=128, min_n_pad=256)
    out = jax.block_until_ready(out)

    ref = hgcn_reference(x, adj, pool, w1, b1, w2, b2, c)

    assert out.shape == (num_graphs, channel_out)
    assert bool(jnp.all(jnp.isfinite(out)))
    assert bool(jnp.allclose(jnp.sum(jnp.exp(out), axis=1), 1.0, atol=1e-3))
    # bf16 adjacency / tangent-intermediate matmuls + EUP approximate reciprocals =>
    # tolerance looser than pure f32, still tight on log-prob scale.
    assert bool(jnp.allclose(out, ref, atol=5e-2, rtol=5e-2)), (out, ref)

    print("KERNEL_OK")
</pallas_src>

<mosaic_0001>
module attributes {stable_mosaic.version = 11 : i64} {
  func.func @_linear1_kernel(%arg0: i32, %arg1: memref<64x128xf32, #tpu.memory_space<vmem>>, %arg2: memref<128x128xf32, #tpu.memory_space<vmem>>, %arg3: memref<1x128xf32, #tpu.memory_space<vmem>>, %arg4: memref<64x128xbf16, #tpu.memory_space<vmem>>) attributes {dimension_semantics = [#tpu.dimension_semantics<parallel>], iteration_bounds = array<i64: 4>, scalar_prefetch = 0 : i64, scratch_operands = 0 : i64, tpu.core_type = #tpu.core_type<tc>, window_params = [{transform_indices = @transform_0, window_bounds = array<i64: 64, 128>}, {pipeline_mode = #tpu.pipeline_mode<synchronous>, transform_indices = @transform_1, window_bounds = array<i64: 128, 128>}, {pipeline_mode = #tpu.pipeline_mode<synchronous>, transform_indices = @transform_2, window_bounds = array<i64: 1, 128>}, {transform_indices = @transform_3, window_bounds = array<i64: 64, 128>}]} {
    %0 = tpu.iota {dimensions = array<i32: 1>} : vector<64x128xi32>
    %c0_i32 = arith.constant 0 : i32
    %1 = vector.broadcast %c0_i32 : i32 to vector<64x128xi32>
    %2 = arith.cmpi eq, %0, %1 : vector<64x128xi32>
    %3 = tpu.iota {dimensions = array<i32: 1>} : vector<64x128xi32>
    %c0_i32_0 = arith.constant 0 : i32
    %4 = vector.broadcast %c0_i32_0 : i32 to vector<64x128xi32>
    %5 = arith.cmpi eq, %3, %4 : vector<64x128xi32>
    %c0 = arith.constant 0 : index
    %c0_1 = arith.constant 0 : index
    %6 = vector.load %arg1[%c0, %c0_1] : memref<64x128xf32, #tpu.memory_space<vmem>>, vector<64x128xf32>
    %c0_2 = arith.constant 0 : index
    %c0_3 = arith.constant 0 : index
    %7 = vector.load %arg2[%c0_2, %c0_3] : memref<128x128xf32, #tpu.memory_space<vmem>>, vector<128x128xf32>
    %c0_4 = arith.constant 0 : index
    %c0_5 = arith.constant 0 : index
    %8 = vector.load %arg3[%c0_4, %c0_5] : memref<1x128xf32, #tpu.memory_space<vmem>>, vector<1x128xf32>
    %cst = arith.constant 0.000000e+00 : f32
    %9 = vector.broadcast %cst : f32 to vector<64x128xf32>
    %10 = arith.select %2, %9, %6 : vector<64x128xi1>, vector<64x128xf32>
    %11 = arith.mulf %10, %10 : vector<64x128xf32>
    %cst_6 = arith.constant dense<0.000000e+00> : vector<64xf32>
    %12 = vector.multi_reduction <add>, %11, %cst_6 [1] : vector<64x128xf32> to vector<64xf32>
    %13 = vector.shape_cast %12 : vector<64xf32> to vector<64x1xf32>
    %cst_7 = arith.constant 1.000000e-30 : f32
    %14 = vector.broadcast %cst_7 : f32 to vector<64x1xf32>
    %15 = arith.maximumf %13, %14 : vector<64x1xf32>
    %16 = math.rsqrt %15 : vector<64x1xf32>
    %cst_8 = arith.constant 0.000000e+00 : f32
    %17 = vector.broadcast %cst_8 : f32 to vector<64x128xf32>
    %18 = arith.select %2, %6, %17 : vector<64x128xi1>, vector<64x128xf32>
    %cst_9 = arith.constant dense<0.000000e+00> : vector<64xf32>
    %19 = vector.multi_reduction <add>, %18, %cst_9 [1] : vector<64x128xf32> to vector<64xf32>
    %20 = vector.shape_cast %19 : vector<64xf32> to vector<64x1xf32>
    %cst_10 = arith.constant 1.000000e+00 : f32
    %21 = vector.broadcast %cst_10 : f32 to vector<64x1xf32>
    %22 = arith.mulf %20, %21 : vector<64x1xf32>
    %cst_11 = arith.constant 1.00000012 : f32
    %23 = vector.broadcast %cst_11 : f32 to vector<64x1xf32>
    %24 = arith.maximumf %22, %23 : vector<64x1xf32>
    %25 = arith.mulf %24, %24 : vector<64x1xf32>
    %cst_12 = arith.constant 1.000000e+00 : f32
    %26 = vector.broadcast %cst_12 : f32 to vector<64x1xf32>
    %27 = arith.subf %25, %26 : vector<64x1xf32>
    %cst_13 = arith.constant 1.000000e-07 : f32
    %28 = vector.broadcast %cst_13 : f32 to vector<64x1xf32>
    %29 = arith.maximumf %27, %28 : vector<64x1xf32>
    %30 = math.sqrt %29 : vector<64x1xf32>
    %31 = arith.addf %24, %30 : vector<64x1xf32>
    %32 = math.log %31 : vector<64x1xf32>
    %cst_14 = arith.constant 1.000000e+00 : f32
    %33 = vector.broadcast %cst_14 : f32 to vector<64x1xf32>
    %34 = arith.mulf %33, %32 : vector<64x1xf32>
    %35 = arith.mulf %34, %16 : vector<64x1xf32>
    %36 = vector.broadcast %35 : vector<64x1xf32> to vector<64x128xf32>
    %37 = arith.mulf %36, %6 : vector<64x128xf32>
    %cst_15 = arith.constant 0.000000e+00 : f32
    %38 = vector.broadcast %cst_15 : f32 to vector<64x128xf32>
    %39 = arith.select %2, %38, %37 : vector<64x128xi1>, vector<64x128xf32>
    %cst_16 = arith.constant dense<0.000000e+00> : vector<64x128xf32>
    %40 = tpu.matmul %39, %7, %cst_16 {dimension_numbers = #tpu.dot_dimension_numbers<[1], [0], [0], [1], [0, 0, 1, 1], [], []>} : vector<64x128xf32>, vector<128x128xf32>, vector<64x128xf32> -> vector<64x128xf32>
    %cst_17 = arith.constant 0.000000e+00 : f32
    %41 = vector.broadcast %cst_17 : f32 to vector<64x128xf32>
    %42 = arith.select %5, %41, %40 : vector<64x128xi1>, vector<64x128xf32>
    %43 = arith.mulf %42, %42 : vector<64x128xf32>
    %cst_18 = arith.constant dense<0.000000e+00> : vector<64xf32>
    %44 = vector.multi_reduction <add>, %43, %cst_18 [1] : vector<64x128xf32> to vector<64xf32>
    %45 = vector.shape_cast %44 : vector<64xf32> to vector<64x1xf32>
    %cst_19 = arith.constant 1.000000e-30 : f32
    %46 = vector.broadcast %cst_19 : f32 to vector<64x1xf32>
    %47 = arith.maximumf %45, %46 : vector<64x1xf32>
    %48 = math.rsqrt %47 : vector<64x1xf32>
    %49 = arith.mulf %47, %48 : vector<64x1xf32>
    %cst_20 = arith.constant 1.000000e+00 : f32
    %50 = vector.broadcast %cst_20 : f32 to vector<64x1xf32>
    %51 = arith.mulf %49, %50 : vector<64x1xf32>
    %52 = math.exp %51 : vector<64x1xf32>
    %53 = tpu.reciprocal %52 {approx = true} : vector<64x1xf32> -> vector<64x1xf32>
    %54 = arith.addf %52, %53 : vector<64x1xf32>
    %cst_21 = arith.constant 5.000000e-01 : f32
    %55 = vector.broadcast %cst_21 : f32 to vector<64x1xf32>
    %56 = arith.mulf %55, %54 : vector<64x1xf32>
    %57 = arith.subf %52, %53 : vector<64x1xf32>
    %cst_22 = arith.constant 5.000000e-01 : f32
    %58 = vector.broadcast %cst_22 : f32 to vector<64x1xf32>
    %59 = arith.mulf %58, %57 : vector<64x1xf32>
    %cst_23 = arith.constant 1.000000e+00 : f32
    %60 = vector.broadcast %cst_23 : f32 to vector<64x1xf32>
    %61 = arith.mulf %60, %56 : vector<64x1xf32>
    %cst_24 = arith.constant 1.000000e+00 : f32
    %62 = vector.broadcast %cst_24 : f32 to vector<64x1xf32>
    %63 = arith.mulf %62, %59 : vector<64x1xf32>
    %64 = arith.mulf %63, %48 : vector<64x1xf32>
    %65 = vector.broadcast %64 : vector<64x1xf32> to vector<64x128xf32>
    %66 = arith.mulf %65, %40 : vector<64x128xf32>
    %67 = vector.shape_cast %61 : vector<64x1xf32> to vector<64x1xf32>
    %68 = vector.broadcast %67 : vector<64x1xf32> to vector<64x128xf32>
    %69 = arith.select %5, %68, %66 : vector<64x128xi1>, vector<64x128xf32>
    %cst_25 = arith.constant 0.000000e+00 : f32
    %70 = vector.broadcast %cst_25 : f32 to vector<64x128xf32>
    %71 = arith.select %5, %70, %69 : vector<64x128xi1>, vector<64x128xf32>
    %72 = arith.mulf %71, %71 : vector<64x128xf32>
    %cst_26 = arith.constant dense<0.000000e+00> : vector<64xf32>
    %73 = vector.multi_reduction <add>, %72, %cst_26 [1] : vector<64x128xf32> to vector<64xf32>
    %74 = vector.shape_cast %73 : vector<64xf32> to vector<64x1xf32>
    %cst_27 = arith.constant 1.000000e+00 : f32
    %75 = vector.broadcast %cst_27 : f32 to vector<64x1xf32>
    %76 = arith.addf %75, %74 : vector<64x1xf32>
    %cst_28 = arith.constant 1.000000e-07 : f32
    %77 = vector.broadcast %cst_28 : f32 to vector<64x1xf32>
    %78 = arith.maximumf %76, %77 : vector<64x1xf32>
    %79 = math.sqrt %78 : vector<64x1xf32>
    %80 = vector.shape_cast %79 : vector<64x1xf32> to vector<64x1xf32>
    %81 = vector.broadcast %80 : vector<64x1xf32> to vector<64x128xf32>
    %82 = arith.select %5, %81, %69 : vector<64x128xi1>, vector<64x128xf32>
    %cst_29 = arith.constant 0.000000e+00 : f32
    %83 = vector.broadcast %cst_29 : f32 to vector<64x128xf32>
    %84 = arith.select %5, %82, %83 : vector<64x128xi1>, vector<64x128xf32>
    %cst_30 = arith.constant dense<0.000000e+00> : vector<64xf32>
    %85 = vector.multi_reduction <add>, %84, %cst_30 [1] : vector<64x128xf32> to vector<64xf32>
    %86 = vector.shape_cast %85 : vector<64xf32> to vector<64x1xf32>
    %cst_31 = arith.constant 0.000000e+00 : f32
    %87 = vector.broadcast %cst_31 : f32 to vector<64x128xf32>
    %88 = arith.select %5, %87, %82 : vector<64x128xi1>, vector<64x128xf32>
    %89 = arith.mulf %88, %88 : vector<64x128xf32>
    %cst_32 = arith.constant dense<0.000000e+00> : vector<64xf32>
    %90 = vector.multi_reduction <add>, %89, %cst_32 [1] : vector<64x128xf32> to vector<64xf32>
    %91 = vector.shape_cast %90 : vector<64xf32> to vector<64x1xf32>
    %cst_33 = arith.constant 1.000000e-30 : f32
    %92 = vector.broadcast %cst_33 : f32 to vector<64x1xf32>
    %93 = arith.maximumf %91, %92 : vector<64x1xf32>
    %94 = math.rsqrt %93 : vector<64x1xf32>
    %95 = arith.mulf %93, %94 : vector<64x1xf32>
    %cst_34 = arith.constant 0.000000e+00 : f32
    %96 = vector.broadcast %cst_34 : f32 to vector<64x128xf32>
    %97 = arith.select %5, %96, %82 : vector<64x128xi1>, vector<64x128xf32>
    %98 = vector.broadcast %94 : vector<64x1xf32> to vector<64x128xf32>
    %99 = arith.mulf %97, %98 : vector<64x128xf32>
    %cst_35 = arith.constant 0.000000e+00 : f32
    %100 = vector.broadcast %cst_35 : f32 to vector<64x1xf32>
    %101 = arith.subf %100, %95 : vector<64x1xf32>
    %cst_36 = arith.constant 1.000000e+00 : f32
    %102 = vector.broadcast %cst_36 : f32 to vector<64x1xf32>
    %103 = arith.subf %102, %86 : vector<64x1xf32>
    %104 = vector.broadcast %103 : vector<64x1xf32> to vector<64x128xf32>
    %105 = arith.mulf %104, %99 : vector<64x128xf32>
    %106 = vector.shape_cast %101 : vector<64x1xf32> to vector<64x1xf32>
    %107 = vector.broadcast %106 : vector<64x1xf32> to vector<64x128xf32>
    %108 = arith.select %5, %107, %105 : vector<64x128xi1>, vector<64x128xf32>
    %109 = vector.broadcast %8 : vector<1x128xf32> to vector<64x128xf32>
    %110 = arith.mulf %99, %109 : vector<64x128xf32>
    %cst_37 = arith.constant 0.000000e+00 : f32
    %111 = vector.broadcast %cst_37 : f32 to vector<64x128xf32>
    %112 = arith.select %5, %111, %110 : vector<64x128xi1>, vector<64x128xf32>
    %cst_38 = arith.constant dense<0.000000e+00> : vector<64xf32>
    %113 = vector.multi_reduction <add>, %112, %cst_38 [1] : vector<64x128xf32> to vector<64xf32>
    %114 = vector.shape_cast %113 : vector<64xf32> to vector<64x1xf32>
    %cst_39 = arith.constant 1.000000e+00 : f32
    %115 = vector.broadcast %cst_39 : f32 to vector<64x1xf32>
    %116 = arith.mulf %114, %115 : vector<64x1xf32>
    %117 = vector.broadcast %116 : vector<64x1xf32> to vector<64x128xf32>
    %118 = arith.mulf %117, %108 : vector<64x128xf32>
    %119 = vector.broadcast %8 : vector<1x128xf32> to vector<64x128xf32>
    %120 = arith.subf %119, %118 : vector<64x128xf32>
    %121 = arith.mulf %82, %120 : vector<64x128xf32>
    %cst_40 = arith.constant 0.000000e+00 : f32
    %122 = vector.broadcast %cst_40 : f32 to vector<64x128xf32>
    %123 = arith.select %5, %122, %121 : vector<64x128xi1>, vector<64x128xf32>
    %cst_41 = arith.constant dense<0.000000e+00> : vector<64xf32>
    %124 = vector.multi_reduction <add>, %123, %cst_41 [1] : vector<64x128xf32> to vector<64xf32>
    %125 = vector.shape_cast %124 : vector<64xf32> to vector<64x1xf32>
    %cst_42 = arith.constant 0.000000e+00 : f32
    %126 = vector.broadcast %cst_42 : f32 to vector<64x128xf32>
    %127 = arith.select %5, %82, %126 : vector<64x128xi1>, vector<64x128xf32>
    %cst_43 = arith.constant dense<0.000000e+00> : vector<64xf32>
    %128 = vector.multi_reduction <add>, %127, %cst_43 [1] : vector<64x128xf32> to vector<64xf32>
    %129 = vector.shape_cast %128 : vector<64xf32> to vector<64x1xf32>
    %cst_44 = arith.constant 1.000000e-15 : f32
    %130 = vector.broadcast %cst_44 : f32 to vector<64x1xf32>
    %131 = arith.maximumf %129, %130 : vector<64x1xf32>
    %132 = tpu.reciprocal %131 {approx = true} : vector<64x1xf32> -> vector<64x1xf32>
    %133 = arith.mulf %125, %132 : vector<64x1xf32>
    %134 = vector.shape_cast %133 : vector<64x1xf32> to vector<64x1xf32>
    %135 = vector.broadcast %134 : vector<64x1xf32> to vector<64x128xf32>
    %136 = arith.select %5, %135, %120 : vector<64x128xi1>, vector<64x128xf32>
    %137 = arith.mulf %136, %136 : vector<64x128xf32>
    %cst_45 = arith.constant dense<0.000000e+00> : vector<64xf32>
    %138 = vector.multi_reduction <add>, %137, %cst_45 [1] : vector<64x128xf32> to vector<64xf32>
    %139 = vector.shape_cast %138 : vector<64xf32> to vector<64x1xf32>
    %cst_46 = arith.constant 0.000000e+00 : f32
    %140 = vector.broadcast %cst_46 : f32 to vector<64x128xf32>
    %141 = arith.select %5, %136, %140 : vector<64x128xi1>, vector<64x128xf32>
    %cst_47 = arith.constant dense<0.000000e+00> : vector<64xf32>
    %142 = vector.multi_reduction <add>, %141, %cst_47 [1] : vector<64x128xf32> to vector<64xf32>
    %143 = vector.shape_cast %142 : vector<64xf32> to vector<64x1xf32>
    %144 = arith.mulf %143, %143 : vector<64x1xf32>
    %cst_48 = arith.constant 2.000000e+00 : f32
    %145 = vector.broadcast %cst_48 : f32 to vector<64x1xf32>
    %146 = arith.mulf %145, %144 : vector<64x1xf32>
    %147 = arith.subf %139, %146 : vector<64x1xf32>
    %cst_49 = arith.constant 1.000000e-07 : f32
    %148 = vector.broadcast %cst_49 : f32 to vector<64x1xf32>
    %149 = arith.maximumf %147, %148 : vector<64x1xf32>
    %150 = math.sqrt %149 : vector<64x1xf32>
    %cst_50 = arith.constant 1.000000e+06 : f32
    %151 = vector.broadcast %cst_50 : f32 to vector<64x1xf32>
    %152 = arith.minimumf %150, %151 : vector<64x1xf32>
    %cst_51 = arith.constant 1.000000e+00 : f32
    %153 = vector.broadcast %cst_51 : f32 to vector<64x1xf32>
    %154 = arith.mulf %152, %153 : vector<64x1xf32>
    %cst_52 = arith.constant 1.000000e-15 : f32
    %155 = vector.broadcast %cst_52 : f32 to vector<64x1xf32>
    %156 = arith.maximumf %154, %155 : vector<64x1xf32>
    %157 = math.exp %156 : vector<64x1xf32>
    %158 = tpu.reciprocal %157 {approx = true} : vector<64x1xf32> -> vector<64x1xf32>
    %159 = arith.addf %157, %158 : vector<64x1xf32>
    %cst_53 = arith.constant 5.000000e-01 : f32
    %160 = vector.broadcast %cst_53 : f32 to vector<64x1xf32>
    %161 = arith.mulf %160, %159 : vector<64x1xf32>
    %162 = arith.subf %157, %158 : vector<64x1xf32>
    %cst_54 = arith.constant 5.000000e-01 : f32
    %163 = vector.broadcast %cst_54 : f32 to vector<64x1xf32>
    %164 = arith.mulf %163, %162 : vector<64x1xf32>
    %165 = vector.broadcast %161 : vector<64x1xf32> to vector<64x128xf32>
    %166 = arith.mulf %165, %82 : vector<64x128xf32>
    %167 = tpu.reciprocal %156 {approx = true} : vector<64x1xf32> -> vector<64x1xf32>
    %168 = arith.mulf %164, %167 : vector<64x1xf32>
    %169 = vector.broadcast %168 : vector<64x1xf32> to vector<64x128xf32>
    %170 = arith.mulf %169, %136 : vector<64x128xf32>
    %171 = arith.addf %166, %170 : vector<64x128xf32>
    %cst_55 = arith.constant 0.000000e+00 : f32
    %172 = vector.broadcast %cst_55 : f32 to vector<64x128xf32>
    %173 = arith.select %5, %172, %171 : vector<64x128xi1>, vector<64x128xf32>
    %174 = arith.mulf %173, %173 : vector<64x128xf32>
    %cst_56 = arith.constant dense<0.000000e+00> : vector<64xf32>
    %175 = vector.multi_reduction <add>, %174, %cst_56 [1] : vector<64x128xf32> to vector<64xf32>
    %176 = vector.shape_cast %175 : vector<64xf32> to vector<64x1xf32>
    %cst_57 = arith.constant 1.000000e+00 : f32
    %177 = vector.broadcast %cst_57 : f32 to vector<64x1xf32>
    %178 = arith.addf %177, %176 : vector<64x1xf32>
    %cst_58 = arith.constant 1.000000e-07 : f32
    %179 = vector.broadcast %cst_58 : f32 to vector<64x1xf32>
    %180 = arith.maximumf %178, %179 : vector<64x1xf32>
    %181 = math.sqrt %180 : vector<64x1xf32>
    %182 = vector.shape_cast %181 : vector<64x1xf32> to vector<64x1xf32>
    %183 = vector.broadcast %182 : vector<64x1xf32> to vector<64x128xf32>
    %184 = arith.select %5, %183, %171 : vector<64x128xi1>, vector<64x128xf32>
    %cst_59 = arith.constant 0.000000e+00 : f32
    %185 = vector.broadcast %cst_59 : f32 to vector<64x128xf32>
    %186 = arith.select %5, %185, %184 : vector<64x128xi1>, vector<64x128xf32>
    %187 = arith.mulf %186, %186 : vector<64x128xf32>
    %cst_60 = arith.constant dense<0.000000e+00> : vector<64xf32>
    %188 = vector.multi_reduction <add>, %187, %cst_60 [1] : vector<64x128xf32> to vector<64xf32>
    %189 = vector.shape_cast %188 : vector<64xf32> to vector<64x1xf32>
    %cst_61 = arith.constant 1.000000e-30 : f32
    %190 = vector.broadcast %cst_61 : f32 to vector<64x1xf32>
    %191 = arith.maximumf %189, %190 : vector<64x1xf32>
    %192 = math.rsqrt %191 : vector<64x1xf32>
    %cst_62 = arith.constant 0.000000e+00 : f32
    %193 = vector.broadcast %cst_62 : f32 to vector<64x128xf32>
    %194 = arith.select %5, %184, %193 : vector<64x128xi1>, vector<64x128xf32>
    %cst_63 = arith.constant dense<0.000000e+00> : vector<64xf32>
    %195 = vector.multi_reduction <add>, %194, %cst_63 [1] : vector<64x128xf32> to vector<64xf32>
    %196 = vector.shape_cast %195 : vector<64xf32> to vector<64x1xf32>
    %cst_64 = arith.constant 1.000000e+00 : f32
    %197 = vector.broadcast %cst_64 : f32 to vector<64x1xf32>
    %198 = arith.mulf %196, %197 : vector<64x1xf32>
    %cst_65 = arith.constant 1.00000012 : f32
    %199 = vector.broadcast %cst_65 : f32 to vector<64x1xf32>
    %200 = arith.maximumf %198, %199 : vector<64x1xf32>
    %201 = arith.mulf %200, %200 : vector<64x1xf32>
    %cst_66 = arith.constant 1.000000e+00 : f32
    %202 = vector.broadcast %cst_66 : f32 to vector<64x1xf32>
    %203 = arith.subf %201, %202 : vector<64x1xf32>
    %cst_67 = arith.constant 1.000000e-07 : f32
    %204 = vector.broadcast %cst_67 : f32 to vector<64x1xf32>
    %205 = arith.maximumf %203, %204 : vector<64x1xf32>
    %206 = math.sqrt %205 : vector<64x1xf32>
    %207 = arith.addf %200, %206 : vector<64x1xf32>
    %208 = math.log %207 : vector<64x1xf32>
    %cst_68 = arith.constant 1.000000e+00 : f32
    %209 = vector.broadcast %cst_68 : f32 to vector<64x1xf32>
    %210 = arith.mulf %209, %208 : vector<64x1xf32>
    %211 = arith.mulf %210, %192 : vector<64x1xf32>
    %212 = vector.broadcast %211 : vector<64x1xf32> to vector<64x128xf32>
    %213 = arith.mulf %212, %184 : vector<64x128xf32>
    %cst_69 = arith.constant 0.000000e+00 : f32
    %214 = vector.broadcast %cst_69 : f32 to vector<64x128xf32>
    %215 = arith.select %5, %214, %213 : vector<64x128xi1>, vector<64x128xf32>
    %216 = arith.truncf %215 : vector<64x128xf32> to vector<64x128xbf16>
    %c0_70 = arith.constant 0 : index
    %c0_71 = arith.constant 0 : index
    %217 = vector.load %arg4[%c0_70, %c0_71] : memref<64x128xbf16, #tpu.memory_space<vmem>>, vector<64x128xbf16>
    tpu.vector_store %arg4[%c0_70, %c0_71], %216 {strides = array<i32>} : memref<64x128xbf16, #tpu.memory_space<vmem>>, vector<64x128xbf16>,
    return
  }
  func.func @transform_0(%arg0: i32) -> (i32, i32) {
    %c0_i32 = arith.constant 0 : i32
    %c0_i32_0 = arith.constant 0 : i32
    return %arg0, %c0_i32 : i32, i32
  }
  func.func @transform_1(%arg0: i32) -> (i32, i32) {
    %c0_i32 = arith.constant 0 : i32
    %c0_i32_0 = arith.constant 0 : i32
    %c0_i32_1 = arith.constant 0 : i32
    return %c0_i32, %c0_i32_0 : i32, i32
  }
  func.func @transform_2(%arg0: i32) -> (i32, i32) {
    %c0_i32 = arith.constant 0 : i32
    %c0_i32_0 = arith.constant 0 : i32
    %c0_i32_1 = arith.constant 0 : i32
    return %c0_i32, %c0_i32_0 : i32, i32
  }
  func.func @transform_3(%arg0: i32) -> (i32, i32) {
    %c0_i32 = arith.constant 0 : i32
    %c0_i32_0 = arith.constant 0 : i32
    return %arg0, %c0_i32 : i32, i32
  }
}

</mosaic_0001>

<llo_original>
// kernel: tpu_custom_call.1
$region0: #{tpu_custom_call.1}
  #allocation0 [shape = 'u32[]', space=smem, size = 0x4, offset = 0x4, fixed_abs, tag = 'smem constant byte address 0x4 - core index']
  #allocation1 [shape = 'u32[72,128]{1,0:T(1,128)}', space=vmem, size = 0x9000, scoped, tag = 'internal scratch']
  %s0 = inlined_call_operand.hbm [shape: f32[256,128], index: 0, kind: input, shape index: {}]
  %s1 = inlined_call_operand.hbm [shape: f32[128,128], index: 1, kind: input, shape index: {}]
  %s2 = inlined_call_operand.vmem [shape: f32[1,128], index: 2, kind: input, shape index: {}]
  %s3 = inlined_call_operand.hbm [shape: bf16[256,128], index: 3, kind: output, shape index: {}]
  %s4 = sld [smem:[#allocation0]]
  $region53: #{tpu_custom_call.1} parent=0
    _
  %s6 = ssub.s32 1, %s4
  %s7 = scalar_select 0, %s6, %s4
  $region1: #{tpu_custom_call.1} parent=0
    #allocation2 [shape = 'u8[65536]{0}', space=vmem, size = 0x10000, scoped, tag = 'input window, operand 0']
    #allocation3 [shape = 's32[2]{0}', space=sflag, size = 0x8, scoped, tag = 'scoped memory for tpu_custom_call.1']
    #allocation4 [shape = 's32[2]{0}', space=sflag, size = 0x8, scoped, tag = 'scoped memory for tpu_custom_call.1']
    #allocation5 [shape = 'u8[65536]{0}', space=vmem, size = 0x10000, scoped, tag = 'input window, operand 1, single buffered']
    #allocation6 [shape = 's32[1]{0}', space=sflag, size = 0x4, scoped, tag = 'scoped memory for tpu_custom_call.1']
    #allocation7 [shape = 'u8[32768]{0}', space=vmem, size = 0x8000, scoped, tag = 'output window, operand 0']
    %8 = vsyncpa [#allocation3], 0
    %s9 = scalar_lea.sflag [#allocation3], 1
    %10 = vsyncpa %s9, 0
    %11 = vsyncpa [#allocation6], 0
    %12 = vsyncpa [#allocation4], 0
    %s13 = scalar_lea.sflag [#allocation4], 1
    %14 = vsyncpa %s13, 0
    loop: start=0, step=1, limit=6
    $region2: #{tpu_custom_call.1} parent=1 // loop_pre_header
      _
    $region3: #{tpu_custom_call.1} parent=1 // loop_header
      %s16 = sphi 0, %s20
      %p17 = scmp.ge.s32.totalorder %s16, 6
      %s26 = sphi 0, %s28
      %s29 = sphi 0, %s26
      %s30 = sphi 0, %s29
      %s46 = sphi 0, %s30
      %s50 = sphi 0, %s50
      %s52 = sphi 0, %s50
      %s53 = sphi 0, %s52
      %s67 = sphi 0, %s53
      %s71 = sphi 0, %s71
      %s73 = sphi 0, %s71
      %s74 = sphi 0, %s73
      %s88 = sphi 0, %s74
      %s94 = sphi 0, %s96
      %s97 = sphi 0, %s94
      %s98 = sphi 0, %s97
      %s114 = sphi 0, %s98
    $region4: #{tpu_custom_call.1} parent=1 // loop_header_branch
      %19 = sbr.rel (%p17) target = $region8
    $region5: #{tpu_custom_call.1} parent=1 // loop_body
      %s21 = ssub.s32 %s16, 1
      %s22 = ssub.s32 %s16, 2
      %s23 = sadd.s32 %s16, 1
      %s24 = ssub.s32 %s16, %s23
      %p25 = scmp.eq.s32.totalorder %s24, 0
      %s27 = sadd.s32 %s26, 1
      %s28 = scalar_select %p25, %s26, %s27
      %p31 = pneg %p25
      %p32 = scmp.eq.s32.totalorder %s16, 3
      %p33 = por %p31, %p32
      %p34 = scmp.ne.s32.totalorder %s26, %s29
      %p35 = scmp.eq.s32.totalorder %s16, 0
      %p36 = por %p34, %p35
      %p37 = scmp.ne.s32.totalorder %s26, %s29
      %p38 = scmp.eq.s32.totalorder %s21, 3
      %p39 = por %p37, %p38
      %p40 = scmp.ne.s32.totalorder %s29, %s30
      %p41 = scmp.eq.s32.totalorder %s21, 0
      %p42 = por %p40, %p41
      %p43 = scmp.ne.s32.totalorder %s29, %s30
      %p44 = scmp.eq.s32.totalorder %s22, 3
      %p45 = por %p43, %p44
      %p47 = scmp.ne.s32.totalorder %s30, %s46
      %p48 = scmp.eq.s32.totalorder %s22, 0
      %p49 = por %p47, %p48
      %s51 = sadd.s32 %s50, 1
      %p54 = scmp.eq.s32.totalorder %s16, 3
      %p55 = scmp.ne.s32.totalorder %s50, %s52
      %p56 = scmp.eq.s32.totalorder %s16, 0
      %p57 = por %p55, %p56
      %p58 = scmp.ne.s32.totalorder %s50, %s52
      %p59 = scmp.eq.s32.totalorder %s21, 3
      %p60 = por %p58, %p59
      %p61 = scmp.ne.s32.totalorder %s52, %s53
      %p62 = scmp.eq.s32.totalorder %s21, 0
      %p63 = por %p61, %p62
      %p64 = scmp.ne.s32.totalorder %s52, %s53
      %p65 = scmp.eq.s32.totalorder %s22, 3
      %p66 = por %p64, %p65
      %p68 = scmp.ne.s32.totalorder %s53, %s67
      %p69 = scmp.eq.s32.totalorder %s22, 0
      %p70 = por %p68, %p69
      %s72 = sadd.s32 %s71, 1
      %p75 = scmp.eq.s32.totalorder %s16, 3
      %p76 = scmp.ne.s32.totalorder %s71, %s73
      %p77 = scmp.eq.s32.totalorder %s16, 0
      %p78 = por %p76, %p77
      %p79 = scmp.ne.s32.totalorder %s71, %s73
      %p80 = scmp.eq.s32.totalorder %s21, 3
      %p81 = por %p79, %p80
      %p82 = scmp.ne.s32.totalorder %s73, %s74
      %p83 = scmp.eq.s32.totalorder %s21, 0
      %p84 = por %p82, %p83
      %p85 = scmp.ne.s32.totalorder %s73, %s74
      %p86 = scmp.eq.s32.totalorder %s22, 3
      %p87 = por %p85, %p86
      %p89 = scmp.ne.s32.totalorder %s74, %s88
      %p90 = scmp.eq.s32.totalorder %s22, 0
      %p91 = por %p89, %p90
      %s92 = ssub.s32 %s16, %s23
      %p93 = scmp.eq.s32.totalorder %s92, 0
      %s95 = sadd.s32 %s94, 1
      %s96 = scalar_select %p93, %s94, %s95
      %p99 = pneg %p93
      %p100 = scmp.eq.s32.totalorder %s16, 3
      %p101 = por %p99, %p100
      %p102 = scmp.ne.s32.totalorder %s94, %s97
      %p103 = scmp.eq.s32.totalorder %s16, 0
      %p104 = por %p102, %p103
      %p105 = scmp.ne.s32.totalorder %s94, %s97
      %p106 = scmp.eq.s32.totalorder %s21, 3
      %p107 = por %p105, %p106
      %p108 = scmp.ne.s32.totalorder %s97, %s98
      %p109 = scmp.eq.s32.totalorder %s21, 0
      %p110 = por %p108, %p109
      %p111 = scmp.ne.s32.totalorder %s97, %s98
      %p112 = scmp.eq.s32.totalorder %s22, 3
      %p113 = por %p111, %p112
      %p115 = scmp.ne.s32.totalorder %s98, %s114
      %p116 = scmp.eq.s32.totalorder %s22, 0
      %p117 = por %p115, %p116
      %p118 = scmp.le.s32.totalorder 1, %s16
      %p119 = scmp.lt.s32.totalorder %s16, 5
      %p120 = pnand %p118, %p119
      %p121 = pneg %p120
      // Predicated region
      $region9: #{tpu_custom_call.1} parent=5 // pred_check
        _
      $region10: #{tpu_custom_call.1} parent=5 // pred_check_branch
        %123 = sbr.rel (%p120) target = $region12
      $region11: #{tpu_custom_call.1} parent=5 // pred_region
        %s124 = ssub.s32 %s16, 1
        // Predicated region
        $region13: #{tpu_custom_call.1} parent=11 // pred_check
          %p125 = pneg %p63
        $region14: #{tpu_custom_call.1} parent=11 // pred_check_branch
          %127 = sbr.rel (%p125) target = $region16
        $region15: #{tpu_custom_call.1} parent=11 // pred_region
          %129 = vsyncadd [#allocation6], 0
          %s130 = sshll.u32 %s1, 4
          %s131 = int_to_ptr.hbm [resolvable:$true] %s130
          %s132 = sshll.u32 [#allocation5], 4
          %s133 = int_to_ptr.vmem [resolvable:$true] %s132
          %138 = dma.hbm_to_vmem [thread:$0]  %s131, 2048, %s133, [#allocation6], 128, 128, 8
        $region16: #{tpu_custom_call.1} parent=11 // pred_fallthru
          _
        // Predicated region
        $region17: #{tpu_custom_call.1} parent=11 // pred_check
          %p139 = pneg %p84
        $region18: #{tpu_custom_call.1} parent=11 // pred_check_branch
          %141 = sbr.rel (%p139) target = $region20
        $region19: #{tpu_custom_call.1} parent=11 // pred_region
          _
        $region20: #{tpu_custom_call.1} parent=11 // pred_fallthru
          _
      $region12: #{tpu_custom_call.1} parent=5 // pred_fallthru
        _
      %p142 = scmp.lt.s32.totalorder %s16, 4
      // Predicated region
      $region21: #{tpu_custom_call.1} parent=5 // pred_check
        %p143 = pneg %p142
      $region22: #{tpu_custom_call.1} parent=5 // pred_check_branch
        %145 = sbr.rel (%p143) target = $region24
      $region23: #{tpu_custom_call.1} parent=5 // pred_region
        // Predicated region
        $region25: #{tpu_custom_call.1} parent=23 // pred_check
          %p146 = pneg %p36
        $region26: #{tpu_custom_call.1} parent=23 // pred_check_branch
          %148 = sbr.rel (%p146) target = $region28
        $region27: #{tpu_custom_call.1} parent=23 // pred_region
          %s149 = sand.u32 %s26, 1
          %s150 = scalar_lea.sflag [#allocation3], %s149
          %s151 = sand.u32 %s26, 1
          %s152 = smul.addr %s151, 64
          %s153 = scalar_lea.vmem [#allocation2], %s152
          %s154 = smul.u32 8, %s16
          %156 = vsyncadd %s150, 0
          %s157 = smul.addr %s154, 8
          %s158 = scalar_lea.hbm %s0, %s157
          %s159 = sshll.u32 %s158, 4
          %s160 = int_to_ptr.hbm [resolvable:$true] %s159
          %s161 = sshll.u32 %s153, 4
          %s162 = int_to_ptr.vmem [resolvable:$true] %s161
          %167 = dma.hbm_to_vmem [thread:$0]  %s160, 1024, %s162, %s150, 128, 128, 8
        $region28: #{tpu_custom_call.1} parent=23 // pred_fallthru
          _
      $region24: #{tpu_custom_call.1} parent=5 // pred_fallthru
        _
      %p168 = scmp.le.s32.totalorder 1, %s16
      %p169 = scmp.lt.s32.totalorder %s16, 5
      %p170 = pnand %p168, %p169
      %p171 = pneg %p170
      // Predicated region
      $region29: #{tpu_custom_call.1} parent=5 // pred_check
        _
      $region30: #{tpu_custom_call.1} parent=5 // pred_check_branch
        %173 = sbr.rel (%p170) target = $region32
      $region31: #{tpu_custom_call.1} parent=5 // pred_region
        %s174 = ssub.s32 %s16, 1
        %s175 = sand.u32 %s29, 1
        %s176 = scalar_lea.sflag [#allocation3], %s175
        %s177 = sand.u32 %s29, 1
        %s178 = smul.addr %s177, 64
        %s179 = scalar_lea.vmem [#allocation2], %s178
        // Predicated region
        $region33: #{tpu_custom_call.1} parent=31 // pred_check
          %p180 = pneg %p42
        $region34: #{tpu_custom_call.1} parent=31 // pred_check_branch
          %182 = sbr.rel (%p180) target = $region36
        $region35: #{tpu_custom_call.1} parent=31 // pred_region
          %184 = dma.done %s176, 1024
        $region36: #{tpu_custom_call.1} parent=31 // pred_fallthru
          _
        // Predicated region
        $region37: #{tpu_custom_call.1} parent=31 // pred_check
          %p185 = pneg %p63
        $region38: #{tpu_custom_call.1} parent=31 // pred_check_branch
          %187 = sbr.rel (%p185) target = $region40
        $region39: #{tpu_custom_call.1} parent=31 // pred_region
          %189 = dma.done [#allocation6], 2048
        $region40: #{tpu_custom_call.1} parent=31 // pred_fallthru
          _
        %s190 = sand.u32 %s29, 1
        %s191 = scalar_lea.sflag [#allocation3], %s190
        %s192 = sand.u32 %s29, 1
        %s193 = smul.addr %s192, 64
        %s194 = scalar_lea.vmem [#allocation2], %s193
        %p195 = pneg %p42
        %p196 = pneg %p39
        %p197 = pneg %p63
        %p198 = pneg %p60
        %p199 = pneg %p84
        %p200 = pneg %p81
        %p201 = pneg %p110
        %p202 = pneg %p107
        %s203 = sand.u32 %s97, 1
        %s204 = scalar_lea.sflag [#allocation4], %s203
        %s205 = sand.u32 %s97, 1
        %s206 = smul.addr %s205, 32
        %s207 = scalar_lea.vmem [#allocation7], %s206
        %s208 = smul.u32 8, %s21
        %s209 = smul.u32 8, %s21
        %v210 = vlaneseq
        %v211 = vand.u32 %v210, 127
        %vm212 = vcmp.eq.s32.totalorder %v211, 0
        %v213 = vld [vmem:[%s179] sm:$0xff]
        %v214 = vld [vmem:[%s179 + $0x8] sm:$0xff]
        %v215 = vld [vmem:[%s179 + $0x10] sm:$0xff]
        %v216 = vld [vmem:[%s179 + $0x18] sm:$0xff]
        %v217 = vld [vmem:[%s179 + $0x20] sm:$0xff]
        %v218 = vld [vmem:[%s179 + $0x28] sm:$0xff]
        %v219 = vld [vmem:[%s179 + $0x30] sm:$0xff]
        %v220 = vld [vmem:[%s179 + $0x38] sm:$0xff]
        %v221 = vld [vmem:[#allocation5] sm:$0xff]
        %v222 = vld [vmem:[#allocation5 + $0x8] sm:$0xff]
        %v223 = vld [vmem:[#allocation5 + $0x10] sm:$0xff]
        %v224 = vld [vmem:[#allocation5 + $0x18] sm:$0xff]
        %v225 = vld [vmem:[#allocation5 + $0x20] sm:$0xff]
        %v226 = vld [vmem:[#allocation5 + $0x28] sm:$0xff]
        %v227 = vld [vmem:[#allocation5 + $0x30] sm:$0xff]
        %v228 = vld [vmem:[#allocation5 + $0x38] sm:$0xff]
        %v229 = vld [vmem:[#allocation5 + $0x40] sm:$0xff]
        %v230 = vld [vmem:[#allocation5 + $0x48] sm:$0xff]
        %v231 = vld [vmem:[#allocation5 + $0x50] sm:$0xff]
        %v232 = vld [vmem:[#allocation5 + $0x58] sm:$0xff]
        %v233 = vld [vmem:[#allocation5 + $0x60] sm:$0xff]
        %v234 = vld [vmem:[#allocation5 + $0x68] sm:$0xff]
        %v235 = vld [vmem:[#allocation5 + $0x70] sm:$0xff]
        %v236 = vld [vmem:[#allocation5 + $0x78] sm:$0xff]
        %v237 = vld [vmem:[%s2] sm:$0x1]
        %v238 = vsel %vm212, 0.0, %v213
        %v239 = vsel %vm212, 0.0, %v214
        %v240 = vsel %vm212, 0.0, %v215
        %v241 = vsel %vm212, 0.0, %v216
        %v242 = vsel %vm212, 0.0, %v217
        %v243 = vsel %vm212, 0.0, %v218
        %v244 = vsel %vm212, 0.0, %v219
        %v245 = vsel %vm212, 0.0, %v220
        %v246 = vmul.f32 %v238, %v238
        %v247 = vmul.f32 %v239, %v239
        %v248 = vmul.f32 %v240, %v240
        %v249 = vmul.f32 %v241, %v241
        %v250 = vmul.f32 %v242, %v242
        %v251 = vmul.f32 %v243, %v243
        %v252 = vmul.f32 %v244, %v244
        %v253 = vmul.f32 %v245, %v245
        %254 = vadd.xlane.f32.xlu0 %v246
        %v255 = vpop.xlane.xlu0 %254
        %256 = vadd.xlane.f32.xlu0 %v247
        %v257 = vpop.xlane.xlu0 %256
        %258 = vadd.xlane.f32.xlu0 %v248
        %v259 = vpop.xlane.xlu0 %258
        %260 = vadd.xlane.f32.xlu0 %v249
        %v261 = vpop.xlane.xlu0 %260
        %262 = vadd.xlane.f32.xlu0 %v250
        %v263 = vpop.xlane.xlu0 %262
        %264 = vadd.xlane.f32.xlu0 %v251
        %v265 = vpop.xlane.xlu0 %264
        %266 = vadd.xlane.f32.xlu0 %v252
        %v267 = vpop.xlane.xlu0 %266
        %268 = vadd.xlane.f32.xlu0 %v253
        %v269 = vpop.xlane.xlu0 %268
        %v270 = vmax.f32 %v255, 1e-30
        %v271 = vmax.f32 %v257, 1e-30
        %v272 = vmax.f32 %v259, 1e-30
        %v273 = vmax.f32 %v261, 1e-30
        %v274 = vmax.f32 %v263, 1e-30
        %v275 = vmax.f32 %v265, 1e-30
        %v276 = vmax.f32 %v267, 1e-30
        %v277 = vmax.f32 %v269, 1e-30
        %v278 = vrsqrt.pop %v270
        %v279 = vmul.f32 %v278, %v270
        %v280 = vmul.f32 %v279, %v278
        %v281 = vmul.f32 0.5, %v280
        %v282 = vsub.f32 1.5, %v281
        %v283 = vmul.f32 %v278, %v282
        %vm284 = vweird.f32 %v270
        %vm285 = vweird.f32 %v278
        %vm286 = vmor %vm284, %vm285
        %v287 = vsel %vm286, %v278, %v283
        %v288 = vrsqrt.pop %v271
        %v289 = vmul.f32 %v288, %v271
        %v290 = vmul.f32 %v289, %v288
        %v291 = vmul.f32 0.5, %v290
        %v292 = vsub.f32 1.5, %v291
        %v293 = vmul.f32 %v288, %v292
        %vm294 = vweird.f32 %v271
        %vm295 = vweird.f32 %v288
        %vm296 = vmor %vm294, %vm295
        %v297 = vsel %vm296, %v288, %v293
        %v298 = vrsqrt.pop %v272
        %v299 = vmul.f32 %v298, %v272
        %v300 = vmul.f32 %v299, %v298
        %v301 = vmul.f32 0.5, %v300
        %v302 = vsub.f32 1.5, %v301
        %v303 = vmul.f32 %v298, %v302
        %vm304 = vweird.f32 %v272
        %vm305 = vweird.f32 %v298
        %vm306 = vmor %vm304, %vm305
        %v307 = vsel %vm306, %v298, %v303
        %v308 = vrsqrt.pop %v273
        %v309 = vmul.f32 %v308, %v273
        %v310 = vmul.f32 %v309, %v308
        %v311 = vmul.f32 0.5, %v310
        %v312 = vsub.f32 1.5, %v311
        %v313 = vmul.f32 %v308, %v312
        %vm314 = vweird.f32 %v273
        %vm315 = vweird.f32 %v308
        %vm316 = vmor %vm314, %vm315
        %v317 = vsel %vm316, %v308, %v313
        %v318 = vrsqrt.pop %v274
        %v319 = vmul.f32 %v318, %v274
        %v320 = vmul.f32 %v319, %v318
        %v321 = vmul.f32 0.5, %v320
        %v322 = vsub.f32 1.5, %v321
        %v323 = vmul.f32 %v318, %v322
        %vm324 = vweird.f32 %v274
        %vm325 = vweird.f32 %v318
        %vm326 = vmor %vm324, %vm325
        %v327 = vsel %vm326, %v318, %v323
        %v328 = vrsqrt.pop %v275
        %v329 = vmul.f32 %v328, %v275
        %v330 = vmul.f32 %v329, %v328
        %v331 = vmul.f32 0.5, %v330
        %v332 = vsub.f32 1.5, %v331
        %v333 = vmul.f32 %v328, %v332
        %vm334 = vweird.f32 %v275
        %vm335 = vweird.f32 %v328
        %vm336 = vmor %vm334, %vm335
        %v337 = vsel %vm336, %v328, %v333
        %v338 = vrsqrt.pop %v276
        %v339 = vmul.f32 %v338, %v276
        %v340 = vmul.f32 %v339, %v338
        %v341 = vmul.f32 0.5, %v340
        %v342 = vsub.f32 1.5, %v341
        %v343 = vmul.f32 %v338, %v342
        %vm344 = vweird.f32 %v276
        %vm345 = vweird.f32 %v338
        %vm346 = vmor %vm344, %vm345
        %v347 = vsel %vm346, %v338, %v343
        %v348 = vrsqrt.pop %v277
        %v349 = vmul.f32 %v348, %v277
        %v350 = vmul.f32 %v349, %v348
        %v351 = vmul.f32 0.5, %v350
        %v352 = vsub.f32 1.5, %v351
        %v353 = vmul.f32 %v348, %v352
        %vm354 = vweird.f32 %v277
        %vm355 = vweird.f32 %v348
        %vm356 = vmor %vm354, %vm355
        %v357 = vsel %vm356, %v348, %v353
        %v358 = vsel %vm212, %v213, 0.0
        %v359 = vsel %vm212, %v214, 0.0
        %v360 = vsel %vm212, %v215, 0.0
        %v361 = vsel %vm212, %v216, 0.0
        %v362 = vsel %vm212, %v217, 0.0
        %v363 = vsel %vm212, %v218, 0.0
        %v364 = vsel %vm212, %v219, 0.0
        %v365 = vsel %vm212, %v220, 0.0
        %366 = vadd.xlane.f32.xlu0 %v358
        %v367 = vpop.xlane.xlu0 %366
        %368 = vadd.xlane.f32.xlu0 %v359
        %v369 = vpop.xlane.xlu0 %368
        %370 = vadd.xlane.f32.xlu0 %v360
        %v371 = vpop.xlane.xlu0 %370
        %372 = vadd.xlane.f32.xlu0 %v361
        %v373 = vpop.xlane.xlu0 %372
        %374 = vadd.xlane.f32.xlu0 %v362
        %v375 = vpop.xlane.xlu0 %374
        %376 = vadd.xlane.f32.xlu0 %v363
        %v377 = vpop.xlane.xlu0 %376
        %378 = vadd.xlane.f32.xlu0 %v364
        %v379 = vpop.xlane.xlu0 %378
        %380 = vadd.xlane.f32.xlu0 %v365
        %v381 = vpop.xlane.xlu0 %380
        %v382 = vmax.f32 %v367, 1.0000001
        %v383 = vmax.f32 %v369, 1.0000001
        %v384 = vmax.f32 %v371, 1.0000001
        %v385 = vmax.f32 %v373, 1.0000001
        %v386 = vmax.f32 %v375, 1.0000001
        %v387 = vmax.f32 %v377, 1.0000001
        %v388 = vmax.f32 %v379, 1.0000001
        %v389 = vmax.f32 %v381, 1.0000001
        %v390 = vmul.f32 %v382, %v382
        %v391 = vmul.f32 %v383, %v383
        %v392 = vmul.f32 %v384, %v384
        %v393 = vmul.f32 %v385, %v385
        %v394 = vmul.f32 %v386, %v386
        %v395 = vmul.f32 %v387, %v387
        %v396 = vmul.f32 %v388, %v388
        %v397 = vmul.f32 %v389, %v389
        %v398 = vsub.f32 %v390, 1.0
        %v399 = vsub.f32 %v391, 1.0
        %v400 = vsub.f32 %v392, 1.0
        %v401 = vsub.f32 %v393, 1.0
        %v402 = vsub.f32 %v394, 1.0
        %v403 = vsub.f32 %v395, 1.0
        %v404 = vsub.f32 %v396, 1.0
        %v405 = vsub.f32 %v397, 1.0
        %v406 = vmax.f32 %v398, 1e-07
        %v407 = vmax.f32 %v399, 1e-07
        %v408 = vmax.f32 %v400, 1e-07
        %v409 = vmax.f32 %v401, 1e-07
        %v410 = vmax.f32 %v402, 1e-07
        %v411 = vmax.f32 %v403, 1e-07
        %v412 = vmax.f32 %v404, 1e-07
        %v413 = vmax.f32 %v405, 1e-07
        %v414 = vrsqrt.pop %v406
        %v415 = vmul.f32 %v414, %v406
        %v416 = vmul.f32 %v415, %v414
        %v417 = vmul.f32 0.5, %v416
        %v418 = vsub.f32 1.5, %v417
        %v419 = vmul.f32 %v414, %v418
        %v420 = vmul.f32 %v406, %v419
        %vm421 = vcmp.eq.f32.partialorder %v406, inf
        %v422 = vsel %vm421, %v406, %v420
        %vm423 = vcmp.eq.f32.partialorder %v406, 0.0
        %v424 = vand.u32 %v406, 2147483648
        %v425 = vsel %vm423, %v424, %v422
        %v426 = vrsqrt.pop %v407
        %v427 = vmul.f32 %v426, %v407
        %v428 = vmul.f32 %v427, %v426
        %v429 = vmul.f32 0.5, %v428
        %v430 = vsub.f32 1.5, %v429
        %v431 = vmul.f32 %v426, %v430
        %v432 = vmul.f32 %v407, %v431
        %vm433 = vcmp.eq.f32.partialorder %v407, inf
        %v434 = vsel %vm433, %v407, %v432
        %vm435 = vcmp.eq.f32.partialorder %v407, 0.0
        %v436 = vand.u32 %v407, 2147483648
        %v437 = vsel %vm435, %v436, %v434
        %v438 = vrsqrt.pop %v408
        %v439 = vmul.f32 %v438, %v408
        %v440 = vmul.f32 %v439, %v438
        %v441 = vmul.f32 0.5, %v440
        %v442 = vsub.f32 1.5, %v441
        %v443 = vmul.f32 %v438, %v442
        %v444 = vmul.f32 %v408, %v443
        %vm445 = vcmp.eq.f32.partialorder %v408, inf
        %v446 = vsel %vm445, %v408, %v444
        %vm447 = vcmp.eq.f32.partialorder %v408, 0.0
        %v448 = vand.u32 %v408, 2147483648
        %v449 = vsel %vm447, %v448, %v446
        %v450 = vrsqrt.pop %v409
        %v451 = vmul.f32 %v450, %v409
        %v452 = vmul.f32 %v451, %v450
        %v453 = vmul.f32 0.5, %v452
        %v454 = vsub.f32 1.5, %v453
        %v455 = vmul.f32 %v450, %v454
        %v456 = vmul.f32 %v409, %v455
        %vm457 = vcmp.eq.f32.partialorder %v409, inf
        %v458 = vsel %vm457, %v409, %v456
        %vm459 = vcmp.eq.f32.partialorder %v409, 0.0
        %v460 = vand.u32 %v409, 2147483648
        %v461 = vsel %vm459, %v460, %v458
        %v462 = vrsqrt.pop %v410
        %v463 = vmul.f32 %v462, %v410
        %v464 = vmul.f32 %v463, %v462
        %v465 = vmul.f32 0.5, %v464
        %v466 = vsub.f32 1.5, %v465
        %v467 = vmul.f32 %v462, %v466
        %v468 = vmul.f32 %v410, %v467
        %vm469 = vcmp.eq.f32.partialorder %v410, inf
        %v470 = vsel %vm469, %v410, %v468
        %vm471 = vcmp.eq.f32.partialorder %v410, 0.0
        %v472 = vand.u32 %v410, 2147483648
        %v473 = vsel %vm471, %v472, %v470
        %v474 = vrsqrt.pop %v411
        %v475 = vmul.f32 %v474, %v411
        %v476 = vmul.f32 %v475, %v474
        %v477 = vmul.f32 0.5, %v476
        %v478 = vsub.f32 1.5, %v477
        %v479 = vmul.f32 %v474, %v478
        %v480 = vmul.f32 %v411, %v479
        %vm481 = vcmp.eq.f32.partialorder %v411, inf
        %v482 = vsel %vm481, %v411, %v480
        %vm483 = vcmp.eq.f32.partialorder %v411, 0.0
        %v484 = vand.u32 %v411, 2147483648
        %v485 = vsel %vm483, %v484, %v482
        %v486 = vrsqrt.pop %v412
        %v487 = vmul.f32 %v486, %v412
        %v488 = vmul.f32 %v487, %v486
        %v489 = vmul.f32 0.5, %v488
        %v490 = vsub.f32 1.5, %v489
        %v491 = vmul.f32 %v486, %v490
        %v492 = vmul.f32 %v412, %v491
        %vm493 = vcmp.eq.f32.partialorder %v412, inf
        %v494 = vsel %vm493, %v412, %v492
        %vm495 = vcmp.eq.f32.partialorder %v412, 0.0
        %v496 = vand.u32 %v412, 2147483648
        %v497 = vsel %vm495, %v496, %v494
        %v498 = vrsqrt.pop %v413
        %v499 = vmul.f32 %v498, %v413
        %v500 = vmul.f32 %v499, %v498
        %v501 = vmul.f32 0.5, %v500
        %v502 = vsub.f32 1.5, %v501
        %v503 = vmul.f32 %v498, %v502
        %v504 = vmul.f32 %v413, %v503
        %vm505 = vcmp.eq.f32.partialorder %v413, inf
        %v506 = vsel %vm505, %v413, %v504
        %vm507 = vcmp.eq.f32.partialorder %v413, 0.0
        %v508 = vand.u32 %v413, 2147483648
        %v509 = vsel %vm507, %v508, %v506
        %v510 = vadd.f32 %v382, %v425
        %v511 = vadd.f32 %v383, %v437
        %v512 = vadd.f32 %v384, %v449
        %v513 = vadd.f32 %v385, %v461
        %v514 = vadd.f32 %v386, %v473
        %v515 = vadd.f32 %v387, %v485
        %v516 = vadd.f32 %v388, %v497
        %v517 = vadd.f32 %v389, %v509
        %v518 = vlog2.pop %v510
        %v519 = vmul.f32 %v518, 0.6931472
        %v520 = vlog2.pop %v511
        %v521 = vmul.f32 %v520, 0.6931472
        %v522 = vlog2.pop %v512
        %v523 = vmul.f32 %v522, 0.6931472
        %v524 = vlog2.pop %v513
        %v525 = vmul.f32 %v524, 0.6931472
        %v526 = vlog2.pop %v514
        %v527 = vmul.f32 %v526, 0.6931472
        %v528 = vlog2.pop %v515
        %v529 = vmul.f32 %v528, 0.6931472
        %v530 = vlog2.pop %v516
        %v531 = vmul.f32 %v530, 0.6931472
        %v532 = vlog2.pop %v517
        %v533 = vmul.f32 %v532, 0.6931472
        %v534 = vmul.f32 %v519, %v287
        %v535 = vmul.f32 %v521, %v297
        %v536 = vmul.f32 %v523, %v307
        %v537 = vmul.f32 %v525, %v317
        %v538 = vmul.f32 %v527, %v327
        %v539 = vmul.f32 %v529, %v337
        %v540 = vmul.f32 %v531, %v347
        %v541 = vmul.f32 %v533, %v357
        %v542 = vmul.f32 %v534, %v213
        %v543 = vmul.f32 %v535, %v214
        %v544 = vmul.f32 %v536, %v215
        %v545 = vmul.f32 %v537, %v216
        %v546 = vmul.f32 %v538, %v217
        %v547 = vmul.f32 %v539, %v218
        %v548 = vmul.f32 %v540, %v219
        %v549 = vmul.f32 %v541, %v220
        %v550 = vsel %vm212, 0.0, %v542
        %v551 = vsel %vm212, 0.0, %v543
        %v552 = vsel %vm212, 0.0, %v544
        %v553 = vsel %vm212, 0.0, %v545
        %v554 = vsel %vm212, 0.0, %v546
        %v555 = vsel %vm212, 0.0, %v547
        %v556 = vsel %vm212, 0.0, %v548
        %v557 = vsel %vm212, 0.0, %v549
        %558 = vmatpush.msra.mxu0 %v236
        %559 = vmatpush.msra.mxu0 %v235
        %560 = vmatpush.msra.mxu0 %v234
        %561 = vmatpush.msra.mxu0 %v233
        %562 = vmatpush.msra.mxu0 %v232
        %563 = vmatpush.msra.mxu0 %v231
        %564 = vmatpush.msra.mxu0 %v230
        %565 = vmatpush.msra.mxu0 %v229
        %566 = vmatpush.msra.mxu0 %v228
        %567 = vmatpush.msra.mxu0 %v227
        %568 = vmatpush.msra.mxu0 %v226
        %569 = vmatpush.msra.mxu0 %v225
        %570 = vmatpush.msra.mxu0 %v224
        %571 = vmatpush.msra.mxu0 %v223
        %572 = vmatpush.msra.mxu0 %v222
        %573 = vmatpush.msra.mxu0 %v221
        %574 = vmatmul.f32.gmra.mxu0 %v550
        %v575 = vpop.f32.mrf.mxu0
        %v576 = vadd.f32 0.0, %v575
        %577 = vmatmul.f32.gmra.mxu0 %v551
        %v578 = vpop.f32.mrf.mxu0
        %v579 = vadd.f32 0.0, %v578
        %580 = vmatmul.f32.gmra.mxu0 %v552
        %v581 = vpop.f32.mrf.mxu0
        %v582 = vadd.f32 0.0, %v581
        %583 = vmatmul.f32.gmra.mxu0 %v553
        %v584 = vpop.f32.mrf.mxu0
        %v585 = vadd.f32 0.0, %v584
        %586 = vmatmul.f32.gmra.mxu0 %v554
        %v587 = vpop.f32.mrf.mxu0
        %v588 = vadd.f32 0.0, %v587
        %589 = vmatmul.f32.gmra.mxu0 %v555
        %v590 = vpop.f32.mrf.mxu0
        %v591 = vadd.f32 0.0, %v590
        %592 = vmatmul.f32.gmra.mxu0 %v556
        %v593 = vpop.f32.mrf.mxu0
        %v594 = vadd.f32 0.0, %v593
        %595 = vmatmul.f32.gmra.mxu0 %v557
        %v596 = vpop.f32.mrf.mxu0
        %v597 = vadd.f32 0.0, %v596
        %598 = vdwg.mxu0
        %v599 = vsel %vm212, 0.0, %v576
        %v600 = vsel %vm212, 0.0, %v579
        %v601 = vsel %vm212, 0.0, %v582
        %v602 = vsel %vm212, 0.0, %v585
        %v603 = vsel %vm212, 0.0, %v588
        %v604 = vsel %vm212, 0.0, %v591
        %v605 = vsel %vm212, 0.0, %v594
        %v606 = vsel %vm212, 0.0, %v597
        %v607 = vmul.f32 %v599, %v599
        %v608 = vmul.f32 %v600, %v600
        %v609 = vmul.f32 %v601, %v601
        %v610 = vmul.f32 %v602, %v602
        %v611 = vmul.f32 %v603, %v603
        %v612 = vmul.f32 %v604, %v604
        %v613 = vmul.f32 %v605, %v605
        %v614 = vmul.f32 %v606, %v606
        %615 = vadd.xlane.f32.xlu0 %v607
        %v616 = vpop.xlane.xlu0 %615
        %617 = vadd.xlane.f32.xlu0 %v608
        %v618 = vpop.xlane.xlu0 %617
        %619 = vadd.xlane.f32.xlu0 %v609
        %v620 = vpop.xlane.xlu0 %619
        %621 = vadd.xlane.f32.xlu0 %v610
        %v622 = vpop.xlane.xlu0 %621
        %623 = vadd.xlane.f32.xlu0 %v611
        %v624 = vpop.xlane.xlu0 %623
        %625 = vadd.xlane.f32.xlu0 %v612
        %v626 = vpop.xlane.xlu0 %625
        %627 = vadd.xlane.f32.xlu0 %v613
        %v628 = vpop.xlane.xlu0 %627
        %629 = vadd.xlane.f32.xlu0 %v614
        %v630 = vpop.xlane.xlu0 %629
        %v631 = vmax.f32 %v616, 1e-30
        %v632 = vmax.f32 %v618, 1e-30
        %v633 = vmax.f32 %v620, 1e-30
        %v634 = vmax.f32 %v622, 1e-30
        %v635 = vmax.f32 %v624, 1e-30
        %v636 = vmax.f32 %v626, 1e-30
        %v637 = vmax.f32 %v628, 1e-30
        %v638 = vmax.f32 %v630, 1e-30
        %v639 = vrsqrt.pop %v631
        %v640 = vmul.f32 %v639, %v631
        %v641 = vmul.f32 %v640, %v639
        %v642 = vmul.f32 0.5, %v641
        %v643 = vsub.f32 1.5, %v642
        %v644 = vmul.f32 %v639, %v643
        %vm645 = vweird.f32 %v631
        %vm646 = vweird.f32 %v639
        %vm647 = vmor %vm645, %vm646
        %v648 = vsel %vm647, %v639, %v644
        %v649 = vrsqrt.pop %v632
        %v650 = vmul.f32 %v649, %v632
        %v651 = vmul.f32 %v650, %v649
        %v652 = vmul.f32 0.5, %v651
        %v653 = vsub.f32 1.5, %v652
        %v654 = vmul.f32 %v649, %v653
        %vm655 = vweird.f32 %v632
        %vm656 = vweird.f32 %v649
        %vm657 = vmor %vm655, %vm656
        %v658 = vsel %vm657, %v649, %v654
        %v659 = vrsqrt.pop %v633
        %v660 = vmul.f32 %v659, %v633
        %v661 = vmul.f32 %v660, %v659
        %v662 = vmul.f32 0.5, %v661
        %v663 = vsub.f32 1.5, %v662
        %v664 = vmul.f32 %v659, %v663
        %vm665 = vweird.f32 %v633
        %vm666 = vweird.f32 %v659
        %vm667 = vmor %vm665, %vm666
        %v668 = vsel %vm667, %v659, %v664
        %v669 = vrsqrt.pop %v634
        %v670 = vmul.f32 %v669, %v634
        %v671 = vmul.f32 %v670, %v669
        %v672 = vmul.f32 0.5, %v671
        %v673 = vsub.f32 1.5, %v672
        %v674 = vmul.f32 %v669, %v673
        %vm675 = vweird.f32 %v634
        %vm676 = vweird.f32 %v669
        %vm677 = vmor %vm675, %vm676
        %v678 = vsel %vm677, %v669, %v674
        %v679 = vrsqrt.pop %v635
        %v680 = vmul.f32 %v679, %v635
        %v681 = vmul.f32 %v680, %v679
        %v682 = vmul.f32 0.5, %v681
        %v683 = vsub.f32 1.5, %v682
        %v684 = vmul.f32 %v679, %v683
        %vm685 = vweird.f32 %v635
        %vm686 = vweird.f32 %v679
        %vm687 = vmor %vm685, %vm686
        %v688 = vsel %vm687, %v679, %v684
        %v689 = vrsqrt.pop %v636
        %v690 = vmul.f32 %v689, %v636
        %v691 = vmul.f32 %v690, %v689
        %v692 = vmul.f32 0.5, %v691
        %v693 = vsub.f32 1.5, %v692
        %v694 = vmul.f32 %v689, %v693
        %vm695 = vweird.f32 %v636
        %vm696 = vweird.f32 %v689
        %vm697 = vmor %vm695, %vm696
        %v698 = vsel %vm697, %v689, %v694
        %v699 = vrsqrt.pop %v637
        %v700 = vmul.f32 %v699, %v637
        %v701 = vmul.f32 %v700, %v699
        %v702 = vmul.f32 0.5, %v701
        %v703 = vsub.f32 1.5, %v702
        %v704 = vmul.f32 %v699, %v703
        %vm705 = vweird.f32 %v637
        %vm706 = vweird.f32 %v699
        %vm707 = vmor %vm705, %vm706
        %v708 = vsel %vm707, %v699, %v704
        %v709 = vrsqrt.pop %v638
        %v710 = vmul.f32 %v709, %v638
        %v711 = vmul.f32 %v710, %v709
        %v712 = vmul.f32 0.5, %v711
        %v713 = vsub.f32 1.5, %v712
        %v714 = vmul.f32 %v709, %v713
        %vm715 = vweird.f32 %v638
        %vm716 = vweird.f32 %v709
        %vm717 = vmor %vm715, %vm716
        %v718 = vsel %vm717, %v709, %v714
        %v719 = vmul.f32 %v631, %v648
        %v720 = vmul.f32 %v632, %v658
        %v721 = vmul.f32 %v633, %v668
        %v722 = vmul.f32 %v634, %v678
        %v723 = vmul.f32 %v635, %v688
        %v724 = vmul.f32 %v636, %v698
        %v725 = vmul.f32 %v637, %v708
        %v726 = vmul.f32 %v638, %v718
        %v727 = vmul.f32 %v719, 1.442695
        %v728 = vpow.pop %v727
        %v729 = vmul.f32 %v720, 1.442695
        %v730 = vpow.pop %v729
        %v731 = vmul.f32 %v721, 1.442695
        %v732 = vpow.pop %v731
        %v733 = vmul.f32 %v722, 1.442695
        %v734 = vpow.pop %v733
        %v735 = vmul.f32 %v723, 1.442695
        %v736 = vpow.pop %v735
        %v737 = vmul.f32 %v724, 1.442695
        %v738 = vpow.pop %v737
        %v739 = vmul.f32 %v725, 1.442695
        %v740 = vpow.pop %v739
        %v741 = vmul.f32 %v726, 1.442695
        %v742 = vpow.pop %v741
        %v743 = vrcp.pop %v728
        %v744 = vrcp.pop %v730
        %v745 = vrcp.pop %v732
        %v746 = vrcp.pop %v734
        %v747 = vrcp.pop %v736
        %v748 = vrcp.pop %v738
        %v749 = vrcp.pop %v740
        %v750 = vrcp.pop %v742
        %v751 = vsub.f32 %v728, %v743
        %v752 = vsub.f32 %v730, %v744
        %v753 = vsub.f32 %v732, %v745
        %v754 = vsub.f32 %v734, %v746
        %v755 = vsub.f32 %v736, %v747
        %v756 = vsub.f32 %v738, %v748
        %v757 = vsub.f32 %v740, %v749
        %v758 = vsub.f32 %v742, %v750
        %v759 = vmul.f32 %v751, 0.5
        %v760 = vmul.f32 %v752, 0.5
        %v761 = vmul.f32 %v753, 0.5
        %v762 = vmul.f32 %v754, 0.5
        %v763 = vmul.f32 %v755, 0.5
        %v764 = vmul.f32 %v756, 0.5
        %v765 = vmul.f32 %v757, 0.5
        %v766 = vmul.f32 %v758, 0.5
        %v767 = vmul.f32 %v759, %v648
        %v768 = vmul.f32 %v760, %v658
        %v769 = vmul.f32 %v761, %v668
        %v770 = vmul.f32 %v762, %v678
        %v771 = vmul.f32 %v763, %v688
        %v772 = vmul.f32 %v764, %v698
        %v773 = vmul.f32 %v765, %v708
        %v774 = vmul.f32 %v766, %v718
        %v775 = vmul.f32 %v767, %v576
        %v776 = vmul.f32 %v768, %v579
        %v777 = vmul.f32 %v769, %v582
        %v778 = vmul.f32 %v770, %v585
        %v779 = vmul.f32 %v771, %v588
        %v780 = vmul.f32 %v772, %v591
        %v781 = vmul.f32 %v773, %v594
        %v782 = vmul.f32 %v774, %v597
        %v783 = vsel %vm212, 0.0, %v775
        %v784 = vsel %vm212, 0.0, %v776
        %v785 = vsel %vm212, 0.0, %v777
        %v786 = vsel %vm212, 0.0, %v778
        %v787 = vsel %vm212, 0.0, %v779
        %v788 = vsel %vm212, 0.0, %v780
        %v789 = vsel %vm212, 0.0, %v781
        %v790 = vsel %vm212, 0.0, %v782
        %v791 = vmul.f32 %v783, %v783
        %v792 = vmul.f32 %v784, %v784
        %v793 = vmul.f32 %v785, %v785
        %v794 = vmul.f32 %v786, %v786
        %v795 = vmul.f32 %v787, %v787
        %v796 = vmul.f32 %v788, %v788
        %v797 = vmul.f32 %v789, %v789
        %v798 = vmul.f32 %v790, %v790
        %799 = vadd.xlane.f32.xlu0 %v791
        %v800 = vpop.xlane.xlu0 %799
        %801 = vadd.xlane.f32.xlu0 %v792
        %v802 = vpop.xlane.xlu0 %801
        %803 = vadd.xlane.f32.xlu0 %v793
        %v804 = vpop.xlane.xlu0 %803
        %805 = vadd.xlane.f32.xlu0 %v794
        %v806 = vpop.xlane.xlu0 %805
        %807 = vadd.xlane.f32.xlu0 %v795
        %v808 = vpop.xlane.xlu0 %807
        %809 = vadd.xlane.f32.xlu0 %v796
        %v810 = vpop.xlane.xlu0 %809
        %811 = vadd.xlane.f32.xlu0 %v797
        %v812 = vpop.xlane.xlu0 %811
        %813 = vadd.xlane.f32.xlu0 %v798
        %v814 = vpop.xlane.xlu0 %813
        %v815 = vadd.f32 %v800, 1.0
        %v816 = vadd.f32 %v802, 1.0
        %v817 = vadd.f32 %v804, 1.0
        %v818 = vadd.f32 %v806, 1.0
        %v819 = vadd.f32 %v808, 1.0
        %v820 = vadd.f32 %v810, 1.0
        %v821 = vadd.f32 %v812, 1.0
        %v822 = vadd.f32 %v814, 1.0
        %v823 = vmax.f32 %v815, 1e-07
        %v824 = vmax.f32 %v816, 1e-07
        %v825 = vmax.f32 %v817, 1e-07
        %v826 = vmax.f32 %v818, 1e-07
        %v827 = vmax.f32 %v819, 1e-07
        %v828 = vmax.f32 %v820, 1e-07
        %v829 = vmax.f32 %v821, 1e-07
        %v830 = vmax.f32 %v822, 1e-07
        %v831 = vrsqrt.pop %v823
        %v832 = vmul.f32 %v831, %v823
        %v833 = vmul.f32 %v832, %v831
        %v834 = vmul.f32 0.5, %v833
        %v835 = vsub.f32 1.5, %v834
        %v836 = vmul.f32 %v831, %v835
        %v837 = vmul.f32 %v823, %v836
        %vm838 = vcmp.eq.f32.partialorder %v823, inf
        %v839 = vsel %vm838, %v823, %v837
        %vm840 = vcmp.eq.f32.partialorder %v823, 0.0
        %v841 = vand.u32 %v823, 2147483648
        %v842 = vsel %vm840, %v841, %v839
        %v843 = vrsqrt.pop %v824
        %v844 = vmul.f32 %v843, %v824
        %v845 = vmul.f32 %v844, %v843
        %v846 = vmul.f32 0.5, %v845
        %v847 = vsub.f32 1.5, %v846
        %v848 = vmul.f32 %v843, %v847
        %v849 = vmul.f32 %v824, %v848
        %vm850 = vcmp.eq.f32.partialorder %v824, inf
        %v851 = vsel %vm850, %v824, %v849
        %vm852 = vcmp.eq.f32.partialorder %v824, 0.0
        %v853 = vand.u32 %v824, 2147483648
        %v854 = vsel %vm852, %v853, %v851
        %v855 = vrsqrt.pop %v825
        %v856 = vmul.f32 %v855, %v825
        %v857 = vmul.f32 %v856, %v855
        %v858 = vmul.f32 0.5, %v857
        %v859 = vsub.f32 1.5, %v858
        %v860 = vmul.f32 %v855, %v859
        %v861 = vmul.f32 %v825, %v860
        %vm862 = vcmp.eq.f32.partialorder %v825, inf
        %v863 = vsel %vm862, %v825, %v861
        %vm864 = vcmp.eq.f32.partialorder %v825, 0.0
        %v865 = vand.u32 %v825, 2147483648
        %v866 = vsel %vm864, %v865, %v863
        %v867 = vrsqrt.pop %v826
        %v868 = vmul.f32 %v867, %v826
        %v869 = vmul.f32 %v868, %v867
        %v870 = vmul.f32 0.5, %v869
        %v871 = vsub.f32 1.5, %v870
        %v872 = vmul.f32 %v867, %v871
        %v873 = vmul.f32 %v826, %v872
        %vm874 = vcmp.eq.f32.partialorder %v826, inf
        %v875 = vsel %vm874, %v826, %v873
        %vm876 = vcmp.eq.f32.partialorder %v826, 0.0
        %v877 = vand.u32 %v826, 2147483648
        %v878 = vsel %vm876, %v877, %v875
        %v879 = vrsqrt.pop %v827
        %v880 = vmul.f32 %v879, %v827
        %v881 = vmul.f32 %v880, %v879
        %v882 = vmul.f32 0.5, %v881
        %v883 = vsub.f32 1.5, %v882
        %v884 = vmul.f32 %v879, %v883
        %v885 = vmul.f32 %v827, %v884
        %vm886 = vcmp.eq.f32.partialorder %v827, inf
        %v887 = vsel %vm886, %v827, %v885
        %vm888 = vcmp.eq.f32.partialorder %v827, 0.0
        %v889 = vand.u32 %v827, 2147483648
        %v890 = vsel %vm888, %v889, %v887
        %v891 = vrsqrt.pop %v828
        %v892 = vmul.f32 %v891, %v828
        %v893 = vmul.f32 %v892, %v891
        %v894 = vmul.f32 0.5, %v893
        %v895 = vsub.f32 1.5, %v894
        %v896 = vmul.f32 %v891, %v895
        %v897 = vmul.f32 %v828, %v896
        %vm898 = vcmp.eq.f32.partialorder %v828, inf
        %v899 = vsel %vm898, %v828, %v897
        %vm900 = vcmp.eq.f32.partialorder %v828, 0.0
        %v901 = vand.u32 %v828, 2147483648
        %v902 = vsel %vm900, %v901, %v899
        %v903 = vrsqrt.pop %v829
        %v904 = vmul.f32 %v903, %v829
        %v905 = vmul.f32 %v904, %v903
        %v906 = vmul.f32 0.5, %v905
        %v907 = vsub.f32 1.5, %v906
        %v908 = vmul.f32 %v903, %v907
        %v909 = vmul.f32 %v829, %v908
        %vm910 = vcmp.eq.f32.partialorder %v829, inf
        %v911 = vsel %vm910, %v829, %v909
        %vm912 = vcmp.eq.f32.partialorder %v829, 0.0
        %v913 = vand.u32 %v829, 2147483648
        %v914 = vsel %vm912, %v913, %v911
        %v915 = vrsqrt.pop %v830
        %v916 = vmul.f32 %v915, %v830
        %v917 = vmul.f32 %v916, %v915
        %v918 = vmul.f32 0.5, %v917
        %v919 = vsub.f32 1.5, %v918
        %v920 = vmul.f32 %v915, %v919
        %v921 = vmul.f32 %v830, %v920
        %vm922 = vcmp.eq.f32.partialorder %v830, inf
        %v923 = vsel %vm922, %v830, %v921
        %vm924 = vcmp.eq.f32.partialorder %v830, 0.0
        %v925 = vand.u32 %v830, 2147483648
        %v926 = vsel %vm924, %v925, %v923
        %v927 = vsel %vm212, %v842, %v775
        %v928 = vsel %vm212, %v854, %v776
        %v929 = vsel %vm212, %v866, %v777
        %v930 = vsel %vm212, %v878, %v778
        %v931 = vsel %vm212, %v890, %v779
        %v932 = vsel %vm212, %v902, %v780
        %v933 = vsel %vm212, %v914, %v781
        %v934 = vsel %vm212, %v926, %v782
        %v935 = vsel %vm212, %v842, 0.0
        %v936 = vsel %vm212, %v854, 0.0
        %v937 = vsel %vm212, %v866, 0.0
        %v938 = vsel %vm212, %v878, 0.0
        %v939 = vsel %vm212, %v890, 0.0
        %v940 = vsel %vm212, %v902, 0.0
        %v941 = vsel %vm212, %v914, 0.0
        %v942 = vsel %vm212, %v926, 0.0
        %943 = vadd.xlane.f32.xlu0 %v935
        %v944 = vpop.xlane.xlu0 %943
        %945 = vadd.xlane.f32.xlu0 %v936
        %v946 = vpop.xlane.xlu0 %945
        %947 = vadd.xlane.f32.xlu0 %v937
        %v948 = vpop.xlane.xlu0 %947
        %949 = vadd.xlane.f32.xlu0 %v938
        %v950 = vpop.xlane.xlu0 %949
        %951 = vadd.xlane.f32.xlu0 %v939
        %v952 = vpop.xlane.xlu0 %951
        %953 = vadd.xlane.f32.xlu0 %v940
        %v954 = vpop.xlane.xlu0 %953
        %955 = vadd.xlane.f32.xlu0 %v941
        %v956 = vpop.xlane.xlu0 %955
        %957 = vadd.xlane.f32.xlu0 %v942
        %v958 = vpop.xlane.xlu0 %957
        %v959 = vmax.f32 %v800, 1e-30
        %v960 = vmax.f32 %v802, 1e-30
        %v961 = vmax.f32 %v804, 1e-30
        %v962 = vmax.f32 %v806, 1e-30
        %v963 = vmax.f32 %v808, 1e-30
        %v964 = vmax.f32 %v810, 1e-30
        %v965 = vmax.f32 %v812, 1e-30
        %v966 = vmax.f32 %v814, 1e-30
        %v967 = vrsqrt.pop %v959
        %v968 = vmul.f32 %v967, %v959
        %v969 = vmul.f32 %v968, %v967
        %v970 = vmul.f32 0.5, %v969
        %v971 = vsub.f32 1.5, %v970
        %v972 = vmul.f32 %v967, %v971
        %vm973 = vweird.f32 %v959
        %vm974 = vweird.f32 %v967
        %vm975 = vmor %vm973, %vm974
        %v976 = vsel %vm975, %v967, %v972
        %v977 = vrsqrt.pop %v960
        %v978 = vmul.f32 %v977, %v960
        %v979 = vmul.f32 %v978, %v977
        %v980 = vmul.f32 0.5, %v979
        %v981 = vsub.f32 1.5, %v980
        %v982 = vmul.f32 %v977, %v981
        %vm983 = vweird.f32 %v960
        %vm984 = vweird.f32 %v977
        %vm985 = vmor %vm983, %vm984
        %v986 = vsel %vm985, %v977, %v982
        %v987 = vrsqrt.pop %v961
        %v988 = vmul.f32 %v987, %v961
        %v989 = vmul.f32 %v988, %v987
        %v990 = vmul.f32 0.5, %v989
        %v991 = vsub.f32 1.5, %v990
        %v992 = vmul.f32 %v987, %v991
        %vm993 = vweird.f32 %v961
        %vm994 = vweird.f32 %v987
        %vm995 = vmor %vm993, %vm994
        %v996 = vsel %vm995, %v987, %v992
        %v997 = vrsqrt.pop %v962
        %v998 = vmul.f32 %v997, %v962
        %v999 = vmul.f32 %v998, %v997
        %v1000 = vmul.f32 0.5, %v999
        %v1001 = vsub.f32 1.5, %v1000
        %v1002 = vmul.f32 %v997, %v1001
        %vm1003 = vweird.f32 %v962
        %vm1004 = vweird.f32 %v997
        %vm1005 = vmor %vm1003, %vm1004
        %v1006 = vsel %vm1005, %v997, %v1002
        %v1007 = vrsqrt.pop %v963
        %v1008 = vmul.f32 %v1007, %v963
        %v1009 = vmul.f32 %v1008, %v1007
        %v1010 = vmul.f32 0.5, %v1009
        %v1011 = vsub.f32 1.5, %v1010
        %v1012 = vmul.f32 %v1007, %v1011
        %vm1013 = vweird.f32 %v963
        %vm1014 = vweird.f32 %v1007
        %vm1015 = vmor %vm1013, %vm1014
        %v1016 = vsel %vm1015, %v1007, %v1012
        %v1017 = vrsqrt.pop %v964
        %v1018 = vmul.f32 %v1017, %v964
        %v1019 = vmul.f32 %v1018, %v1017
        %v1020 = vmul.f32 0.5, %v1019
        %v1021 = vsub.f32 1.5, %v1020
        %v1022 = vmul.f32 %v1017, %v1021
        %vm1023 = vweird.f32 %v964
        %vm1024 = vweird.f32 %v1017
        %vm1025 = vmor %vm1023, %vm1024
        %v1026 = vsel %vm1025, %v1017, %v1022
        %v1027 = vrsqrt.pop %v965
        %v1028 = vmul.f32 %v1027, %v965
        %v1029 = vmul.f32 %v1028, %v1027
        %v1030 = vmul.f32 0.5, %v1029
        %v1031 = vsub.f32 1.5, %v1030
        %v1032 = vmul.f32 %v1027, %v1031
        %vm1033 = vweird.f32 %v965
        %vm1034 = vweird.f32 %v1027
        %vm1035 = vmor %vm1033, %vm1034
        %v1036 = vsel %vm1035, %v1027, %v1032
        %v1037 = vrsqrt.pop %v966
        %v1038 = vmul.f32 %v1037, %v966
        %v1039 = vmul.f32 %v1038, %v1037
        %v1040 = vmul.f32 0.5, %v1039
        %v1041 = vsub.f32 1.5, %v1040
        %v1042 = vmul.f32 %v1037, %v1041
        %vm1043 = vweird.f32 %v966
        %vm1044 = vweird.f32 %v1037
        %vm1045 = vmor %vm1043, %vm1044
        %v1046 = vsel %vm1045, %v1037, %v1042
        %v1047 = vmul.f32 %v959, %v976
        %v1048 = vmul.f32 %v960, %v986
        %v1049 = vmul.f32 %v961, %v996
        %v1050 = vmul.f32 %v962, %v1006
        %v1051 = vmul.f32 %v963, %v1016
        %v1052 = vmul.f32 %v964, %v1026
        %v1053 = vmul.f32 %v965, %v1036
        %v1054 = vmul.f32 %v966, %v1046
        %v1055 = vmul.f32 %v783, %v976
        %v1056 = vmul.f32 %v784, %v986
        %v1057 = vmul.f32 %v785, %v996
        %v1058 = vmul.f32 %v786, %v1006
        %v1059 = vmul.f32 %v787, %v1016
        %v1060 = vmul.f32 %v788, %v1026
        %v1061 = vmul.f32 %v789, %v1036
        %v1062 = vmul.f32 %v790, %v1046
        %v1063 = vsub.f32 0.0, %v1047
        %v1064 = vsub.f32 0.0, %v1048
        %v1065 = vsub.f32 0.0, %v1049
        %v1066 = vsub.f32 0.0, %v1050
        %v1067 = vsub.f32 0.0, %v1051
        %v1068 = vsub.f32 0.0, %v1052
        %v1069 = vsub.f32 0.0, %v1053
        %v1070 = vsub.f32 0.0, %v1054
        %v1071 = vsub.f32 1.0, %v944
        %v1072 = vsub.f32 1.0, %v946
        %v1073 = vsub.f32 1.0, %v948
        %v1074 = vsub.f32 1.0, %v950
        %v1075 = vsub.f32 1.0, %v952
        %v1076 = vsub.f32 1.0, %v954
        %v1077 = vsub.f32 1.0, %v956
        %v1078 = vsub.f32 1.0, %v958
        %v1079 = vmul.f32 %v1071, %v1055
        %v1080 = vmul.f32 %v1072, %v1056
        %v1081 = vmul.f32 %v1073, %v1057
        %v1082 = vmul.f32 %v1074, %v1058
        %v1083 = vmul.f32 %v1075, %v1059
        %v1084 = vmul.f32 %v1076, %v1060
        %v1085 = vmul.f32 %v1077, %v1061
        %v1086 = vmul.f32 %v1078, %v1062
        %v1087 = vsel %vm212, %v1063, %v1079
        %v1088 = vsel %vm212, %v1064, %v1080
        %v1089 = vsel %vm212, %v1065, %v1081
        %v1090 = vsel %vm212, %v1066, %v1082
        %v1091 = vsel %vm212, %v1067, %v1083
        %v1092 = vsel %vm212, %v1068, %v1084
        %v1093 = vsel %vm212, %v1069, %v1085
        %v1094 = vsel %vm212, %v1070, %v1086
        %v1096 = vperm.slane %v237, 0
        %v1098 = vmul.f32 %v1055, %v1096
        %v1099 = vmul.f32 %v1056, %v1096
        %v1100 = vmul.f32 %v1057, %v1096
        %v1101 = vmul.f32 %v1058, %v1096
        %v1102 = vmul.f32 %v1059, %v1096
        %v1103 = vmul.f32 %v1060, %v1096
        %v1104 = vmul.f32 %v1061, %v1096
        %v1105 = vmul.f32 %v1062, %v1096
        %v1106 = vsel %vm212, 0.0, %v1098
        %v1107 = vsel %vm212, 0.0, %v1099
        %v1108 = vsel %vm212, 0.0, %v1100
        %v1109 = vsel %vm212, 0.0, %v1101
        %v1110 = vsel %vm212, 0.0, %v1102
        %v1111 = vsel %vm212, 0.0, %v1103
        %v1112 = vsel %vm212, 0.0, %v1104
        %v1113 = vsel %vm212, 0.0, %v1105
        %1114 = vadd.xlane.f32.xlu0 %v1106
        %v1115 = vpop.xlane.xlu0 %1114
        %1116 = vadd.xlane.f32.xlu0 %v1107
        %v1117 = vpop.xlane.xlu0 %1116
        %1118 = vadd.xlane.f32.xlu0 %v1108
        %v1119 = vpop.xlane.xlu0 %1118
        %1120 = vadd.xlane.f32.xlu0 %v1109
        %v1121 = vpop.xlane.xlu0 %1120
        %1122 = vadd.xlane.f32.xlu0 %v1110
        %v1123 = vpop.xlane.xlu0 %1122
        %1124 = vadd.xlane.f32.xlu0 %v1111
        %v1125 = vpop.xlane.xlu0 %1124
        %1126 = vadd.xlane.f32.xlu0 %v1112
        %v1127 = vpop.xlane.xlu0 %1126
        %1128 = vadd.xlane.f32.xlu0 %v1113
        %v1129 = vpop.xlane.xlu0 %1128
        %v1130 = vmul.f32 %v1115, %v1087
        %v1131 = vmul.f32 %v1117, %v1088
        %v1132 = vmul.f32 %v1119, %v1089
        %v1133 = vmul.f32 %v1121, %v1090
        %v1134 = vmul.f32 %v1123, %v1091
        %v1135 = vmul.f32 %v1125, %v1092
        %v1136 = vmul.f32 %v1127, %v1093
        %v1137 = vmul.f32 %v1129, %v1094
        %v1138 = vsub.f32 %v1096, %v1130
        %v1139 = vsub.f32 %v1096, %v1131
        %v1140 = vsub.f32 %v1096, %v1132
        %v1141 = vsub.f32 %v1096, %v1133
        %v1142 = vsub.f32 %v1096, %v1134
        %v1143 = vsub.f32 %v1096, %v1135
        %v1144 = vsub.f32 %v1096, %v1136
        %v1145 = vsub.f32 %v1096, %v1137
        %v1146 = vmul.f32 %v927, %v1138
        %v1147 = vmul.f32 %v928, %v1139
        %v1148 = vmul.f32 %v929, %v1140
        %v1149 = vmul.f32 %v930, %v1141
        %v1150 = vmul.f32 %v931, %v1142
        %v1151 = vmul.f32 %v932, %v1143
        %v1152 = vmul.f32 %v933, %v1144
        %v1153 = vmul.f32 %v934, %v1145
        %v1154 = vsel %vm212, 0.0, %v1146
        %v1155 = vsel %vm212, 0.0, %v1147
        %v1156 = vsel %vm212, 0.0, %v1148
        %v1157 = vsel %vm212, 0.0, %v1149
        %v1158 = vsel %vm212, 0.0, %v1150
        %v1159 = vsel %vm212, 0.0, %v1151
        %v1160 = vsel %vm212, 0.0, %v1152
        %v1161 = vsel %vm212, 0.0, %v1153
        %1162 = vadd.xlane.f32.xlu0 %v1154
        %v1163 = vpop.xlane.xlu0 %1162
        %1164 = vadd.xlane.f32.xlu0 %v1155
        %v1165 = vpop.xlane.xlu0 %1164
        %1166 = vadd.xlane.f32.xlu0 %v1156
        %v1167 = vpop.xlane.xlu0 %1166
        %1168 = vadd.xlane.f32.xlu0 %v1157
        %v1169 = vpop.xlane.xlu0 %1168
        %1170 = vadd.xlane.f32.xlu0 %v1158
        %v1171 = vpop.xlane.xlu0 %1170
        %1172 = vadd.xlane.f32.xlu0 %v1159
        %v1173 = vpop.xlane.xlu0 %1172
        %1174 = vadd.xlane.f32.xlu0 %v1160
        %v1175 = vpop.xlane.xlu0 %1174
        %1176 = vadd.xlane.f32.xlu0 %v1161
        %v1177 = vpop.xlane.xlu0 %1176
        %v1178 = vmax.f32 %v944, 1e-15
        %v1179 = vmax.f32 %v946, 1e-15
        %v1180 = vmax.f32 %v948, 1e-15
        %v1181 = vmax.f32 %v950, 1e-15
        %v1182 = vmax.f32 %v952, 1e-15
        %v1183 = vmax.f32 %v954, 1e-15
        %v1184 = vmax.f32 %v956, 1e-15
        %v1185 = vmax.f32 %v958, 1e-15
        %v1186 = vrcp.pop %v1178
        %v1187 = vrcp.pop %v1179
        %v1188 = vrcp.pop %v1180
        %v1189 = vrcp.pop %v1181
        %v1190 = vrcp.pop %v1182
        %v1191 = vrcp.pop %v1183
        %v1192 = vrcp.pop %v1184
        %v1193 = vrcp.pop %v1185
        %v1194 = vmul.f32 %v1163, %v1186
        %v1195 = vmul.f32 %v1165, %v1187
        %v1196 = vmul.f32 %v1167, %v1188
        %v1197 = vmul.f32 %v1169, %v1189
        %v1198 = vmul.f32 %v1171, %v1190
        %v1199 = vmul.f32 %v1173, %v1191
        %v1200 = vmul.f32 %v1175, %v1192
        %v1201 = vmul.f32 %v1177, %v1193
        %v1202 = vsel %vm212, %v1194, %v1138
        %v1203 = vsel %vm212, %v1195, %v1139
        %v1204 = vsel %vm212, %v1196, %v1140
        %v1205 = vsel %vm212, %v1197, %v1141
        %v1206 = vsel %vm212, %v1198, %v1142
        %v1207 = vsel %vm212, %v1199, %v1143
        %v1208 = vsel %vm212, %v1200, %v1144
        %v1209 = vsel %vm212, %v1201, %v1145
        %v1210 = vmul.f32 %v1202, %v1202
        %v1211 = vmul.f32 %v1203, %v1203
        %v1212 = vmul.f32 %v1204, %v1204
        %v1213 = vmul.f32 %v1205, %v1205
        %v1214 = vmul.f32 %v1206, %v1206
        %v1215 = vmul.f32 %v1207, %v1207
        %v1216 = vmul.f32 %v1208, %v1208
        %v1217 = vmul.f32 %v1209, %v1209
        %1218 = vadd.xlane.f32.xlu0 %v1210
        %v1219 = vpop.xlane.xlu0 %1218
        %1220 = vadd.xlane.f32.xlu0 %v1211
        %v1221 = vpop.xlane.xlu0 %1220
        %1222 = vadd.xlane.f32.xlu0 %v1212
        %v1223 = vpop.xlane.xlu0 %1222
        %1224 = vadd.xlane.f32.xlu0 %v1213
        %v1225 = vpop.xlane.xlu0 %1224
        %1226 = vadd.xlane.f32.xlu0 %v1214
        %v1227 = vpop.xlane.xlu0 %1226
        %1228 = vadd.xlane.f32.xlu0 %v1215
        %v1229 = vpop.xlane.xlu0 %1228
        %1230 = vadd.xlane.f32.xlu0 %v1216
        %v1231 = vpop.xlane.xlu0 %1230
        %1232 = vadd.xlane.f32.xlu0 %v1217
        %v1233 = vpop.xlane.xlu0 %1232
        %v1234 = vsel %vm212, %v1194, 0.0
        %v1235 = vsel %vm212, %v1195, 0.0
        %v1236 = vsel %vm212, %v1196, 0.0
        %v1237 = vsel %vm212, %v1197, 0.0
        %v1238 = vsel %vm212, %v1198, 0.0
        %v1239 = vsel %vm212, %v1199, 0.0
        %v1240 = vsel %vm212, %v1200, 0.0
        %v1241 = vsel %vm212, %v1201, 0.0
        %1242 = vadd.xlane.f32.xlu0 %v1234
        %v1243 = vpop.xlane.xlu0 %1242
        %1244 = vadd.xlane.f32.xlu0 %v1235
        %v1245 = vpop.xlane.xlu0 %1244
        %1246 = vadd.xlane.f32.xlu0 %v1236
        %v1247 = vpop.xlane.xlu0 %1246
        %1248 = vadd.xlane.f32.xlu0 %v1237
        %v1249 = vpop.xlane.xlu0 %1248
        %1250 = vadd.xlane.f32.xlu0 %v1238
        %v1251 = vpop.xlane.xlu0 %1250
        %1252 = vadd.xlane.f32.xlu0 %v1239
        %v1253 = vpop.xlane.xlu0 %1252
        %1254 = vadd.xlane.f32.xlu0 %v1240
        %v1255 = vpop.xlane.xlu0 %1254
        %1256 = vadd.xlane.f32.xlu0 %v1241
        %v1257 = vpop.xlane.xlu0 %1256
        %v1258 = vmul.f32 %v1243, %v1243
        %v1259 = vmul.f32 %v1245, %v1245
        %v1260 = vmul.f32 %v1247, %v1247
        %v1261 = vmul.f32 %v1249, %v1249
        %v1262 = vmul.f32 %v1251, %v1251
        %v1263 = vmul.f32 %v1253, %v1253
        %v1264 = vmul.f32 %v1255, %v1255
        %v1265 = vmul.f32 %v1257, %v1257
        %v1266 = vmul.f32 %v1258, 2.0
        %v1267 = vmul.f32 %v1259, 2.0
        %v1268 = vmul.f32 %v1260, 2.0
        %v1269 = vmul.f32 %v1261, 2.0
        %v1270 = vmul.f32 %v1262, 2.0
        %v1271 = vmul.f32 %v1263, 2.0
        %v1272 = vmul.f32 %v1264, 2.0
        %v1273 = vmul.f32 %v1265, 2.0
        %v1274 = vsub.f32 %v1219, %v1266
        %v1275 = vsub.f32 %v1221, %v1267
        %v1276 = vsub.f32 %v1223, %v1268
        %v1277 = vsub.f32 %v1225, %v1269
        %v1278 = vsub.f32 %v1227, %v1270
        %v1279 = vsub.f32 %v1229, %v1271
        %v1280 = vsub.f32 %v1231, %v1272
        %v1281 = vsub.f32 %v1233, %v1273
        %v1282 = vmax.f32 %v1274, 1e-07
        %v1283 = vmax.f32 %v1275, 1e-07
        %v1284 = vmax.f32 %v1276, 1e-07
        %v1285 = vmax.f32 %v1277, 1e-07
        %v1286 = vmax.f32 %v1278, 1e-07
        %v1287 = vmax.f32 %v1279, 1e-07
        %v1288 = vmax.f32 %v1280, 1e-07
        %v1289 = vmax.f32 %v1281, 1e-07
        %v1290 = vrsqrt.pop %v1282
        %v1291 = vmul.f32 %v1290, %v1282
        %v1292 = vmul.f32 %v1291, %v1290
        %v1293 = vmul.f32 0.5, %v1292
        %v1294 = vsub.f32 1.5, %v1293
        %v1295 = vmul.f32 %v1290, %v1294
        %v1296 = vmul.f32 %v1282, %v1295
        %vm1297 = vcmp.eq.f32.partialorder %v1282, inf
        %v1298 = vsel %vm1297, %v1282, %v1296
        %vm1299 = vcmp.eq.f32.partialorder %v1282, 0.0
        %v1300 = vand.u32 %v1282, 2147483648
        %v1301 = vsel %vm1299, %v1300, %v1298
        %v1302 = vrsqrt.pop %v1283
        %v1303 = vmul.f32 %v1302, %v1283
        %v1304 = vmul.f32 %v1303, %v1302
        %v1305 = vmul.f32 0.5, %v1304
        %v1306 = vsub.f32 1.5, %v1305
        %v1307 = vmul.f32 %v1302, %v1306
        %v1308 = vmul.f32 %v1283, %v1307
        %vm1309 = vcmp.eq.f32.partialorder %v1283, inf
        %v1310 = vsel %vm1309, %v1283, %v1308
        %vm1311 = vcmp.eq.f32.partialorder %v1283, 0.0
        %v1312 = vand.u32 %v1283, 2147483648
        %v1313 = vsel %vm1311, %v1312, %v1310
        %v1314 = vrsqrt.pop %v1284
        %v1315 = vmul.f32 %v1314, %v1284
        %v1316 = vmul.f32 %v1315, %v1314
        %v1317 = vmul.f32 0.5, %v1316
        %v1318 = vsub.f32 1.5, %v1317
        %v1319 = vmul.f32 %v1314, %v1318
        %v1320 = vmul.f32 %v1284, %v1319
        %vm1321 = vcmp.eq.f32.partialorder %v1284, inf
        %v1322 = vsel %vm1321, %v1284, %v1320
        %vm1323 = vcmp.eq.f32.partialorder %v1284, 0.0
        %v1324 = vand.u32 %v1284, 2147483648
        %v1325 = vsel %vm1323, %v1324, %v1322
        %v1326 = vrsqrt.pop %v1285
        %v1327 = vmul.f32 %v1326, %v1285
        %v1328 = vmul.f32 %v1327, %v1326
        %v1329 = vmul.f32 0.5, %v1328
        %v1330 = vsub.f32 1.5, %v1329
        %v1331 = vmul.f32 %v1326, %v1330
        %v1332 = vmul.f32 %v1285, %v1331
        %vm1333 = vcmp.eq.f32.partialorder %v1285, inf
        %v1334 = vsel %vm1333, %v1285, %v1332
        %vm1335 = vcmp.eq.f32.partialorder %v1285, 0.0
        %v1336 = vand.u32 %v1285, 2147483648
        %v1337 = vsel %vm1335, %v1336, %v1334
        %v1338 = vrsqrt.pop %v1286
        %v1339 = vmul.f32 %v1338, %v1286
        %v1340 = vmul.f32 %v1339, %v1338
        %v1341 = vmul.f32 0.5, %v1340
        %v1342 = vsub.f32 1.5, %v1341
        %v1343 = vmul.f32 %v1338, %v1342
        %v1344 = vmul.f32 %v1286, %v1343
        %vm1345 = vcmp.eq.f32.partialorder %v1286, inf
        %v1346 = vsel %vm1345, %v1286, %v1344
        %vm1347 = vcmp.eq.f32.partialorder %v1286, 0.0
        %v1348 = vand.u32 %v1286, 2147483648
        %v1349 = vsel %vm1347, %v1348, %v1346
        %v1350 = vrsqrt.pop %v1287
        %v1351 = vmul.f32 %v1350, %v1287
        %v1352 = vmul.f32 %v1351, %v1350
        %v1353 = vmul.f32 0.5, %v1352
        %v1354 = vsub.f32 1.5, %v1353
        %v1355 = vmul.f32 %v1350, %v1354
        %v1356 = vmul.f32 %v1287, %v1355
        %vm1357 = vcmp.eq.f32.partialorder %v1287, inf
        %v1358 = vsel %vm1357, %v1287, %v1356
        %vm1359 = vcmp.eq.f32.partialorder %v1287, 0.0
        %v1360 = vand.u32 %v1287, 2147483648
        %v1361 = vsel %vm1359, %v1360, %v1358
        %v1362 = vrsqrt.pop %v1288
        %v1363 = vmul.f32 %v1362, %v1288
        %v1364 = vmul.f32 %v1363, %v1362
        %v1365 = vmul.f32 0.5, %v1364
        %v1366 = vsub.f32 1.5, %v1365
        %v1367 = vmul.f32 %v1362, %v1366
        %v1368 = vmul.f32 %v1288, %v1367
        %vm1369 = vcmp.eq.f32.partialorder %v1288, inf
        %v1370 = vsel %vm1369, %v1288, %v1368
        %vm1371 = vcmp.eq.f32.partialorder %v1288, 0.0
        %v1372 = vand.u32 %v1288, 2147483648
        %v1373 = vsel %vm1371, %v1372, %v1370
        %v1374 = vrsqrt.pop %v1289
        %v1375 = vmul.f32 %v1374, %v1289
        %v1376 = vmul.f32 %v1375, %v1374
        %v1377 = vmul.f32 0.5, %v1376
        %v1378 = vsub.f32 1.5, %v1377
        %v1379 = vmul.f32 %v1374, %v1378
        %v1380 = vmul.f32 %v1289, %v1379
        %vm1381 = vcmp.eq.f32.partialorder %v1289, inf
        %v1382 = vsel %vm1381, %v1289, %v1380
        %vm1383 = vcmp.eq.f32.partialorder %v1289, 0.0
        %v1384 = vand.u32 %v1289, 2147483648
        %v1385 = vsel %vm1383, %v1384, %v1382
        %v1386 = vmin.f32 %v1301, 1000000.0
        %v1387 = vmin.f32 %v1313, 1000000.0
        %v1388 = vmin.f32 %v1325, 1000000.0
        %v1389 = vmin.f32 %v1337, 1000000.0
        %v1390 = vmin.f32 %v1349, 1000000.0
        %v1391 = vmin.f32 %v1361, 1000000.0
        %v1392 = vmin.f32 %v1373, 1000000.0
        %v1393 = vmin.f32 %v1385, 1000000.0
        %v1394 = vmax.f32 %v1386, 1e-15
        %v1395 = vmax.f32 %v1387, 1e-15
        %v1396 = vmax.f32 %v1388, 1e-15
        %v1397 = vmax.f32 %v1389, 1e-15
        %v1398 = vmax.f32 %v1390, 1e-15
        %v1399 = vmax.f32 %v1391, 1e-15
        %v1400 = vmax.f32 %v1392, 1e-15
        %v1401 = vmax.f32 %v1393, 1e-15
        %v1402 = vmul.f32 %v1394, 1.442695
        %v1403 = vpow.pop %v1402
        %v1404 = vmul.f32 %v1395, 1.442695
        %v1405 = vpow.pop %v1404
        %v1406 = vmul.f32 %v1396, 1.442695
        %v1407 = vpow.pop %v1406
        %v1408 = vmul.f32 %v1397, 1.442695
        %v1409 = vpow.pop %v1408
        %v1410 = vmul.f32 %v1398, 1.442695
        %v1411 = vpow.pop %v1410
        %v1412 = vmul.f32 %v1399, 1.442695
        %v1413 = vpow.pop %v1412
        %v1414 = vmul.f32 %v1400, 1.442695
        %v1415 = vpow.pop %v1414
        %v1416 = vmul.f32 %v1401, 1.442695
        %v1417 = vpow.pop %v1416
        %v1418 = vrcp.pop %v1403
        %v1419 = vrcp.pop %v1405
        %v1420 = vrcp.pop %v1407
        %v1421 = vrcp.pop %v1409
        %v1422 = vrcp.pop %v1411
        %v1423 = vrcp.pop %v1413
        %v1424 = vrcp.pop %v1415
        %v1425 = vrcp.pop %v1417
        %v1426 = vadd.f32 %v1403, %v1418
        %v1427 = vadd.f32 %v1405, %v1419
        %v1428 = vadd.f32 %v1407, %v1420
        %v1429 = vadd.f32 %v1409, %v1421
        %v1430 = vadd.f32 %v1411, %v1422
        %v1431 = vadd.f32 %v1413, %v1423
        %v1432 = vadd.f32 %v1415, %v1424
        %v1433 = vadd.f32 %v1417, %v1425
        %v1434 = vmul.f32 %v1426, 0.5
        %v1435 = vmul.f32 %v1427, 0.5
        %v1436 = vmul.f32 %v1428, 0.5
        %v1437 = vmul.f32 %v1429, 0.5
        %v1438 = vmul.f32 %v1430, 0.5
        %v1439 = vmul.f32 %v1431, 0.5
        %v1440 = vmul.f32 %v1432, 0.5
        %v1441 = vmul.f32 %v1433, 0.5
        %v1442 = vsub.f32 %v1403, %v1418
        %v1443 = vsub.f32 %v1405, %v1419
        %v1444 = vsub.f32 %v1407, %v1420
        %v1445 = vsub.f32 %v1409, %v1421
        %v1446 = vsub.f32 %v1411, %v1422
        %v1447 = vsub.f32 %v1413, %v1423
        %v1448 = vsub.f32 %v1415, %v1424
        %v1449 = vsub.f32 %v1417, %v1425
        %v1450 = vmul.f32 %v1442, 0.5
        %v1451 = vmul.f32 %v1443, 0.5
        %v1452 = vmul.f32 %v1444, 0.5
        %v1453 = vmul.f32 %v1445, 0.5
        %v1454 = vmul.f32 %v1446, 0.5
        %v1455 = vmul.f32 %v1447, 0.5
        %v1456 = vmul.f32 %v1448, 0.5
        %v1457 = vmul.f32 %v1449, 0.5
        %v1458 = vmul.f32 %v1434, %v927
        %v1459 = vmul.f32 %v1435, %v928
        %v1460 = vmul.f32 %v1436, %v929
        %v1461 = vmul.f32 %v1437, %v930
        %v1462 = vmul.f32 %v1438, %v931
        %v1463 = vmul.f32 %v1439, %v932
        %v1464 = vmul.f32 %v1440, %v933
        %v1465 = vmul.f32 %v1441, %v934
        %v1466 = vrcp.pop %v1394
        %v1467 = vrcp.pop %v1395
        %v1468 = vrcp.pop %v1396
        %v1469 = vrcp.pop %v1397
        %v1470 = vrcp.pop %v1398
        %v1471 = vrcp.pop %v1399
        %v1472 = vrcp.pop %v1400
        %v1473 = vrcp.pop %v1401
        %v1474 = vmul.f32 %v1450, %v1466
        %v1475 = vmul.f32 %v1451, %v1467
        %v1476 = vmul.f32 %v1452, %v1468
        %v1477 = vmul.f32 %v1453, %v1469
        %v1478 = vmul.f32 %v1454, %v1470
        %v1479 = vmul.f32 %v1455, %v1471
        %v1480 = vmul.f32 %v1456, %v1472
        %v1481 = vmul.f32 %v1457, %v1473
        %v1482 = vmul.f32 %v1474, %v1202
        %v1483 = vmul.f32 %v1475, %v1203
        %v1484 = vmul.f32 %v1476, %v1204
        %v1485 = vmul.f32 %v1477, %v1205
        %v1486 = vmul.f32 %v1478, %v1206
        %v1487 = vmul.f32 %v1479, %v1207
        %v1488 = vmul.f32 %v1480, %v1208
        %v1489 = vmul.f32 %v1481, %v1209
        %v1490 = vadd.f32 %v1458, %v1482
        %v1491 = vadd.f32 %v1459, %v1483
        %v1492 = vadd.f32 %v1460, %v1484
        %v1493 = vadd.f32 %v1461, %v1485
        %v1494 = vadd.f32 %v1462, %v1486
        %v1495 = vadd.f32 %v1463, %v1487
        %v1496 = vadd.f32 %v1464, %v1488
        %v1497 = vadd.f32 %v1465, %v1489
        %v1498 = vsel %vm212, 0.0, %v1490
        %v1499 = vsel %vm212, 0.0, %v1491
        %v1500 = vsel %vm212, 0.0, %v1492
        %v1501 = vsel %vm212, 0.0, %v1493
        %v1502 = vsel %vm212, 0.0, %v1494
        %v1503 = vsel %vm212, 0.0, %v1495
        %v1504 = vsel %vm212, 0.0, %v1496
        %v1505 = vsel %vm212, 0.0, %v1497
        %v1506 = vmul.f32 %v1498, %v1498
        %v1507 = vmul.f32 %v1499, %v1499
        %v1508 = vmul.f32 %v1500, %v1500
        %v1509 = vmul.f32 %v1501, %v1501
        %v1510 = vmul.f32 %v1502, %v1502
        %v1511 = vmul.f32 %v1503, %v1503
        %v1512 = vmul.f32 %v1504, %v1504
        %v1513 = vmul.f32 %v1505, %v1505
        %1514 = vadd.xlane.f32.xlu0 %v1506
        %v1515 = vpop.xlane.xlu0 %1514
        %1516 = vadd.xlane.f32.xlu0 %v1507
        %v1517 = vpop.xlane.xlu0 %1516
        %1518 = vadd.xlane.f32.xlu0 %v1508
        %v1519 = vpop.xlane.xlu0 %1518
        %1520 = vadd.xlane.f32.xlu0 %v1509
        %v1521 = vpop.xlane.xlu0 %1520
        %1522 = vadd.xlane.f32.xlu0 %v1510
        %v1523 = vpop.xlane.xlu0 %1522
        %1524 = vadd.xlane.f32.xlu0 %v1511
        %v1525 = vpop.xlane.xlu0 %1524
        %1526 = vadd.xlane.f32.xlu0 %v1512
        %v1527 = vpop.xlane.xlu0 %1526
        %1528 = vadd.xlane.f32.xlu0 %v1513
        %v1529 = vpop.xlane.xlu0 %1528
        %v1530 = vadd.f32 %v1515, 1.0
        %v1531 = vadd.f32 %v1517, 1.0
        %v1532 = vadd.f32 %v1519, 1.0
        %v1533 = vadd.f32 %v1521, 1.0
        %v1534 = vadd.f32 %v1523, 1.0
        %v1535 = vadd.f32 %v1525, 1.0
        %v1536 = vadd.f32 %v1527, 1.0
        %v1537 = vadd.f32 %v1529, 1.0
        %v1538 = vmax.f32 %v1530, 1e-07
        %v1539 = vmax.f32 %v1531, 1e-07
        %v1540 = vmax.f32 %v1532, 1e-07
        %v1541 = vmax.f32 %v1533, 1e-07
        %v1542 = vmax.f32 %v1534, 1e-07
        %v1543 = vmax.f32 %v1535, 1e-07
        %v1544 = vmax.f32 %v1536, 1e-07
        %v1545 = vmax.f32 %v1537, 1e-07
        %v1546 = vrsqrt.pop %v1538
        %v1547 = vmul.f32 %v1546, %v1538
        %v1548 = vmul.f32 %v1547, %v1546
        %v1549 = vmul.f32 0.5, %v1548
        %v1550 = vsub.f32 1.5, %v1549
        %v1551 = vmul.f32 %v1546, %v1550
        %v1552 = vmul.f32 %v1538, %v1551
        %vm1553 = vcmp.eq.f32.partialorder %v1538, inf
        %v1554 = vsel %vm1553, %v1538, %v1552
        %vm1555 = vcmp.eq.f32.partialorder %v1538, 0.0
        %v1556 = vand.u32 %v1538, 2147483648
        %v1557 = vsel %vm1555, %v1556, %v1554
        %v1558 = vrsqrt.pop %v1539
        %v1559 = vmul.f32 %v1558, %v1539
        %v1560 = vmul.f32 %v1559, %v1558
        %v1561 = vmul.f32 0.5, %v1560
        %v1562 = vsub.f32 1.5, %v1561
        %v1563 = vmul.f32 %v1558, %v1562
        %v1564 = vmul.f32 %v1539, %v1563
        %vm1565 = vcmp.eq.f32.partialorder %v1539, inf
        %v1566 = vsel %vm1565, %v1539, %v1564
        %vm1567 = vcmp.eq.f32.partialorder %v1539, 0.0
        %v1568 = vand.u32 %v1539, 2147483648
        %v1569 = vsel %vm1567, %v1568, %v1566
        %v1570 = vrsqrt.pop %v1540
        %v1571 = vmul.f32 %v1570, %v1540
        %v1572 = vmul.f32 %v1571, %v1570
        %v1573 = vmul.f32 0.5, %v1572
        %v1574 = vsub.f32 1.5, %v1573
        %v1575 = vmul.f32 %v1570, %v1574
        %v1576 = vmul.f32 %v1540, %v1575
        %vm1577 = vcmp.eq.f32.partialorder %v1540, inf
        %v1578 = vsel %vm1577, %v1540, %v1576
        %vm1579 = vcmp.eq.f32.partialorder %v1540, 0.0
        %v1580 = vand.u32 %v1540, 2147483648
        %v1581 = vsel %vm1579, %v1580, %v1578
        %v1582 = vrsqrt.pop %v1541
        %v1583 = vmul.f32 %v1582, %v1541
        %v1584 = vmul.f32 %v1583, %v1582
        %v1585 = vmul.f32 0.5, %v1584
        %v1586 = vsub.f32 1.5, %v1585
        %v1587 = vmul.f32 %v1582, %v1586
        %v1588 = vmul.f32 %v1541, %v1587
        %vm1589 = vcmp.eq.f32.partialorder %v1541, inf
        %v1590 = vsel %vm1589, %v1541, %v1588
        %vm1591 = vcmp.eq.f32.partialorder %v1541, 0.0
        %v1592 = vand.u32 %v1541, 2147483648
        %v1593 = vsel %vm1591, %v1592, %v1590
        %v1594 = vrsqrt.pop %v1542
        %v1595 = vmul.f32 %v1594, %v1542
        %v1596 = vmul.f32 %v1595, %v1594
        %v1597 = vmul.f32 0.5, %v1596
        %v1598 = vsub.f32 1.5, %v1597
        %v1599 = vmul.f32 %v1594, %v1598
        %v1600 = vmul.f32 %v1542, %v1599
        %vm1601 = vcmp.eq.f32.partialorder %v1542, inf
        %v1602 = vsel %vm1601, %v1542, %v1600
        %vm1603 = vcmp.eq.f32.partialorder %v1542, 0.0
        %v1604 = vand.u32 %v1542, 2147483648
        %v1605 = vsel %vm1603, %v1604, %v1602
        %v1606 = vrsqrt.pop %v1543
        %v1607 = vmul.f32 %v1606, %v1543
        %v1608 = vmul.f32 %v1607, %v1606
        %v1609 = vmul.f32 0.5, %v1608
        %v1610 = vsub.f32 1.5, %v1609
        %v1611 = vmul.f32 %v1606, %v1610
        %v1612 = vmul.f32 %v1543, %v1611
        %vm1613 = vcmp.eq.f32.partialorder %v1543, inf
        %v1614 = vsel %vm1613, %v1543, %v1612
        %vm1615 = vcmp.eq.f32.partialorder %v1543, 0.0
        %v1616 = vand.u32 %v1543, 2147483648
        %v1617 = vsel %vm1615, %v1616, %v1614
        %v1618 = vrsqrt.pop %v1544
        %v1619 = vmul.f32 %v1618, %v1544
        %v1620 = vmul.f32 %v1619, %v1618
        %v1621 = vmul.f32 0.5, %v1620
        %v1622 = vsub.f32 1.5, %v1621
        %v1623 = vmul.f32 %v1618, %v1622
        %v1624 = vmul.f32 %v1544, %v1623
        %vm1625 = vcmp.eq.f32.partialorder %v1544, inf
        %v1626 = vsel %vm1625, %v1544, %v1624
        %vm1627 = vcmp.eq.f32.partialorder %v1544, 0.0
        %v1628 = vand.u32 %v1544, 2147483648
        %v1629 = vsel %vm1627, %v1628, %v1626
        %v1630 = vrsqrt.pop %v1545
        %v1631 = vmul.f32 %v1630, %v1545
        %v1632 = vmul.f32 %v1631, %v1630
        %v1633 = vmul.f32 0.5, %v1632
        %v1634 = vsub.f32 1.5, %v1633
        %v1635 = vmul.f32 %v1630, %v1634
        %v1636 = vmul.f32 %v1545, %v1635
        %vm1637 = vcmp.eq.f32.partialorder %v1545, inf
        %v1638 = vsel %vm1637, %v1545, %v1636
        %vm1639 = vcmp.eq.f32.partialorder %v1545, 0.0
        %v1640 = vand.u32 %v1545, 2147483648
        %v1641 = vsel %vm1639, %v1640, %v1638
        %v1642 = vsel %vm212, %v1557, %v1490
        %v1643 = vsel %vm212, %v1569, %v1491
        %v1644 = vsel %vm212, %v1581, %v1492
        %v1645 = vsel %vm212, %v1593, %v1493
        %v1646 = vsel %vm212, %v1605, %v1494
        %v1647 = vsel %vm212, %v1617, %v1495
        %v1648 = vsel %vm212, %v1629, %v1496
        %v1649 = vsel %vm212, %v1641, %v1497
        %v1650 = vmax.f32 %v1515, 1e-30
        %v1651 = vmax.f32 %v1517, 1e-30
        %v1652 = vmax.f32 %v1519, 1e-30
        %v1653 = vmax.f32 %v1521, 1e-30
        %v1654 = vmax.f32 %v1523, 1e-30
        %v1655 = vmax.f32 %v1525, 1e-30
        %v1656 = vmax.f32 %v1527, 1e-30
        %v1657 = vmax.f32 %v1529, 1e-30
        %v1658 = vrsqrt.pop %v1650
        %v1659 = vmul.f32 %v1658, %v1650
        %v1660 = vmul.f32 %v1659, %v1658
        %v1661 = vmul.f32 0.5, %v1660
        %v1662 = vsub.f32 1.5, %v1661
        %v1663 = vmul.f32 %v1658, %v1662
        %vm1664 = vweird.f32 %v1650
        %vm1665 = vweird.f32 %v1658
        %vm1666 = vmor %vm1664, %vm1665
        %v1667 = vsel %vm1666, %v1658, %v1663
        %v1668 = vrsqrt.pop %v1651
        %v1669 = vmul.f32 %v1668, %v1651
        %v1670 = vmul.f32 %v1669, %v1668
        %v1671 = vmul.f32 0.5, %v1670
        %v1672 = vsub.f32 1.5, %v1671
        %v1673 = vmul.f32 %v1668, %v1672
        %vm1674 = vweird.f32 %v1651
        %vm1675 = vweird.f32 %v1668
        %vm1676 = vmor %vm1674, %vm1675
        %v1677 = vsel %vm1676, %v1668, %v1673
        %v1678 = vrsqrt.pop %v1652
        %v1679 = vmul.f32 %v1678, %v1652
        %v1680 = vmul.f32 %v1679, %v1678
        %v1681 = vmul.f32 0.5, %v1680
        %v1682 = vsub.f32 1.5, %v1681
        %v1683 = vmul.f32 %v1678, %v1682
        %vm1684 = vweird.f32 %v1652
        %vm1685 = vweird.f32 %v1678
        %vm1686 = vmor %vm1684, %vm1685
        %v1687 = vsel %vm1686, %v1678, %v1683
        %v1688 = vrsqrt.pop %v1653
        %v1689 = vmul.f32 %v1688, %v1653
        %v1690 = vmul.f32 %v1689, %v1688
        %v1691 = vmul.f32 0.5, %v1690
        %v1692 = vsub.f32 1.5, %v1691
        %v1693 = vmul.f32 %v1688, %v1692
        %vm1694 = vweird.f32 %v1653
        %vm1695 = vweird.f32 %v1688
        %vm1696 = vmor %vm1694, %vm1695
        %v1697 = vsel %vm1696, %v1688, %v1693
        %v1698 = vrsqrt.pop %v1654
        %v1699 = vmul.f32 %v1698, %v1654
        %v1700 = vmul.f32 %v1699, %v1698
        %v1701 = vmul.f32 0.5, %v1700
        %v1702 = vsub.f32 1.5, %v1701
        %v1703 = vmul.f32 %v1698, %v1702
        %vm1704 = vweird.f32 %v1654
        %vm1705 = vweird.f32 %v1698
        %vm1706 = vmor %vm1704, %vm1705
        %v1707 = vsel %vm1706, %v1698, %v1703
        %v1708 = vrsqrt.pop %v1655
        %v1709 = vmul.f32 %v1708, %v1655
        %v1710 = vmul.f32 %v1709, %v1708
        %v1711 = vmul.f32 0.5, %v1710
        %v1712 = vsub.f32 1.5, %v1711
        %v1713 = vmul.f32 %v1708, %v1712
        %vm1714 = vweird.f32 %v1655
        %vm1715 = vweird.f32 %v1708
        %vm1716 = vmor %vm1714, %vm1715
        %v1717 = vsel %vm1716, %v1708, %v1713
        %v1718 = vrsqrt.pop %v1656
        %v1719 = vmul.f32 %v1718, %v1656
        %v1720 = vmul.f32 %v1719, %v1718
        %v1721 = vmul.f32 0.5, %v1720
        %v1722 = vsub.f32 1.5, %v1721
        %v1723 = vmul.f32 %v1718, %v1722
        %vm1724 = vweird.f32 %v1656
        %vm1725 = vweird.f32 %v1718
        %vm1726 = vmor %vm1724, %vm1725
        %v1727 = vsel %vm1726, %v1718, %v1723
        %v1728 = vrsqrt.pop %v1657
        %v1729 = vmul.f32 %v1728, %v1657
        %v1730 = vmul.f32 %v1729, %v1728
        %v1731 = vmul.f32 0.5, %v1730
        %v1732 = vsub.f32 1.5, %v1731
        %v1733 = vmul.f32 %v1728, %v1732
        %vm1734 = vweird.f32 %v1657
        %vm1735 = vweird.f32 %v1728
        %vm1736 = vmor %vm1734, %vm1735
        %v1737 = vsel %vm1736, %v1728, %v1733
        %v1738 = vsel %vm212, %v1557, 0.0
        %v1739 = vsel %vm212, %v1569, 0.0
        %v1740 = vsel %vm212, %v1581, 0.0
        %v1741 = vsel %vm212, %v1593, 0.0
        %v1742 = vsel %vm212, %v1605, 0.0
        %v1743 = vsel %vm212, %v1617, 0.0
        %v1744 = vsel %vm212, %v1629, 0.0
        %v1745 = vsel %vm212, %v1641, 0.0
        %1746 = vadd.xlane.f32.xlu0 %v1738
        %v1747 = vpop.xlane.xlu0 %1746
        %1748 = vadd.xlane.f32.xlu0 %v1739
        %v1749 = vpop.xlane.xlu0 %1748
        %1750 = vadd.xlane.f32.xlu0 %v1740
        %v1751 = vpop.xlane.xlu0 %1750
        %1752 = vadd.xlane.f32.xlu0 %v1741
        %v1753 = vpop.xlane.xlu0 %1752
        %1754 = vadd.xlane.f32.xlu0 %v1742
        %v1755 = vpop.xlane.xlu0 %1754
        %1756 = vadd.xlane.f32.xlu0 %v1743
        %v1757 = vpop.xlane.xlu0 %1756
        %1758 = vadd.xlane.f32.xlu0 %v1744
        %v1759 = vpop.xlane.xlu0 %1758
        %1760 = vadd.xlane.f32.xlu0 %v1745
        %v1761 = vpop.xlane.xlu0 %1760
        %v1762 = vmax.f32 %v1747, 1.0000001
        %v1763 = vmax.f32 %v1749, 1.0000001
        %v1764 = vmax.f32 %v1751, 1.0000001
        %v1765 = vmax.f32 %v1753, 1.0000001
        %v1766 = vmax.f32 %v1755, 1.0000001
        %v1767 = vmax.f32 %v1757, 1.0000001
        %v1768 = vmax.f32 %v1759, 1.0000001
        %v1769 = vmax.f32 %v1761, 1.0000001
        %v1770 = vmul.f32 %v1762, %v1762
        %v1771 = vmul.f32 %v1763, %v1763
        %v1772 = vmul.f32 %v1764, %v1764
        %v1773 = vmul.f32 %v1765, %v1765
        %v1774 = vmul.f32 %v1766, %v1766
        %v1775 = vmul.f32 %v1767, %v1767
        %v1776 = vmul.f32 %v1768, %v1768
        %v1777 = vmul.f32 %v1769, %v1769
        %v1778 = vsub.f32 %v1770, 1.0
        %v1779 = vsub.f32 %v1771, 1.0
        %v1780 = vsub.f32 %v1772, 1.0
        %v1781 = vsub.f32 %v1773, 1.0
        %v1782 = vsub.f32 %v1774, 1.0
        %v1783 = vsub.f32 %v1775, 1.0
        %v1784 = vsub.f32 %v1776, 1.0
        %v1785 = vsub.f32 %v1777, 1.0
        %v1786 = vmax.f32 %v1778, 1e-07
        %v1787 = vmax.f32 %v1779, 1e-07
        %v1788 = vmax.f32 %v1780, 1e-07
        %v1789 = vmax.f32 %v1781, 1e-07
        %v1790 = vmax.f32 %v1782, 1e-07
        %v1791 = vmax.f32 %v1783, 1e-07
        %v1792 = vmax.f32 %v1784, 1e-07
        %v1793 = vmax.f32 %v1785, 1e-07
        %v1794 = vrsqrt.pop %v1786
        %v1795 = vmul.f32 %v1794, %v1786
        %v1796 = vmul.f32 %v1795, %v1794
        %v1797 = vmul.f32 0.5, %v1796
        %v1798 = vsub.f32 1.5, %v1797
        %v1799 = vmul.f32 %v1794, %v1798
        %v1800 = vmul.f32 %v1786, %v1799
        %vm1801 = vcmp.eq.f32.partialorder %v1786, inf
        %v1802 = vsel %vm1801, %v1786, %v1800
        %vm1803 = vcmp.eq.f32.partialorder %v1786, 0.0
        %v1804 = vand.u32 %v1786, 2147483648
        %v1805 = vsel %vm1803, %v1804, %v1802
        %v1806 = vrsqrt.pop %v1787
        %v1807 = vmul.f32 %v1806, %v1787
        %v1808 = vmul.f32 %v1807, %v1806
        %v1809 = vmul.f32 0.5, %v1808
        %v1810 = vsub.f32 1.5, %v1809
        %v1811 = vmul.f32 %v1806, %v1810
        %v1812 = vmul.f32 %v1787, %v1811
        %vm1813 = vcmp.eq.f32.partialorder %v1787, inf
        %v1814 = vsel %vm1813, %v1787, %v1812
        %vm1815 = vcmp.eq.f32.partialorder %v1787, 0.0
        %v1816 = vand.u32 %v1787, 2147483648
        %v1817 = vsel %vm1815, %v1816, %v1814
        %v1818 = vrsqrt.pop %v1788
        %v1819 = vmul.f32 %v1818, %v1788
        %v1820 = vmul.f32 %v1819, %v1818
        %v1821 = vmul.f32 0.5, %v1820
        %v1822 = vsub.f32 1.5, %v1821
        %v1823 = vmul.f32 %v1818, %v1822
        %v1824 = vmul.f32 %v1788, %v1823
        %vm1825 = vcmp.eq.f32.partialorder %v1788, inf
        %v1826 = vsel %vm1825, %v1788, %v1824
        %vm1827 = vcmp.eq.f32.partialorder %v1788, 0.0
        %v1828 = vand.u32 %v1788, 2147483648
        %v1829 = vsel %vm1827, %v1828, %v1826
        %v1830 = vrsqrt.pop %v1789
        %v1831 = vmul.f32 %v1830, %v1789
        %v1832 = vmul.f32 %v1831, %v1830
        %v1833 = vmul.f32 0.5, %v1832
        %v1834 = vsub.f32 1.5, %v1833
        %v1835 = vmul.f32 %v1830, %v1834
        %v1836 = vmul.f32 %v1789, %v1835
        %vm1837 = vcmp.eq.f32.partialorder %v1789, inf
        %v1838 = vsel %vm1837, %v1789, %v1836
        %vm1839 = vcmp.eq.f32.partialorder %v1789, 0.0
        %v1840 = vand.u32 %v1789, 2147483648
        %v1841 = vsel %vm1839, %v1840, %v1838
        %v1842 = vrsqrt.pop %v1790
        %v1843 = vmul.f32 %v1842, %v1790
        %v1844 = vmul.f32 %v1843, %v1842
        %v1845 = vmul.f32 0.5, %v1844
        %v1846 = vsub.f32 1.5, %v1845
        %v1847 = vmul.f32 %v1842, %v1846
        %v1848 = vmul.f32 %v1790, %v1847
        %vm1849 = vcmp.eq.f32.partialorder %v1790, inf
        %v1850 = vsel %vm1849, %v1790, %v1848
        %vm1851 = vcmp.eq.f32.partialorder %v1790, 0.0
        %v1852 = vand.u32 %v1790, 2147483648
        %v1853 = vsel %vm1851, %v1852, %v1850
        %v1854 = vrsqrt.pop %v1791
        %v1855 = vmul.f32 %v1854, %v1791
        %v1856 = vmul.f32 %v1855, %v1854
        %v1857 = vmul.f32 0.5, %v1856
        %v1858 = vsub.f32 1.5, %v1857
        %v1859 = vmul.f32 %v1854, %v1858
        %v1860 = vmul.f32 %v1791, %v1859
        %vm1861 = vcmp.eq.f32.partialorder %v1791, inf
        %v1862 = vsel %vm1861, %v1791, %v1860
        %vm1863 = vcmp.eq.f32.partialorder %v1791, 0.0
        %v1864 = vand.u32 %v1791, 2147483648
        %v1865 = vsel %vm1863, %v1864, %v1862
        %v1866 = vrsqrt.pop %v1792
        %v1867 = vmul.f32 %v1866, %v1792
        %v1868 = vmul.f32 %v1867, %v1866
        %v1869 = vmul.f32 0.5, %v1868
        %v1870 = vsub.f32 1.5, %v1869
        %v1871 = vmul.f32 %v1866, %v1870
        %v1872 = vmul.f32 %v1792, %v1871
        %vm1873 = vcmp.eq.f32.partialorder %v1792, inf
        %v1874 = vsel %vm1873, %v1792, %v1872
        %vm1875 = vcmp.eq.f32.partialorder %v1792, 0.0
        %v1876 = vand.u32 %v1792, 2147483648
        %v1877 = vsel %vm1875, %v1876, %v1874
        %v1878 = vrsqrt.pop %v1793
        %v1879 = vmul.f32 %v1878, %v1793
        %v1880 = vmul.f32 %v1879, %v1878
        %v1881 = vmul.f32 0.5, %v1880
        %v1882 = vsub.f32 1.5, %v1881
        %v1883 = vmul.f32 %v1878, %v1882
        %v1884 = vmul.f32 %v1793, %v1883
        %vm1885 = vcmp.eq.f32.partialorder %v1793, inf
        %v1886 = vsel %vm1885, %v1793, %v1884
        %vm1887 = vcmp.eq.f32.partialorder %v1793, 0.0
        %v1888 = vand.u32 %v1793, 2147483648
        %v1889 = vsel %vm1887, %v1888, %v1886
        %v1890 = vadd.f32 %v1762, %v1805
        %v1891 = vadd.f32 %v1763, %v1817
        %v1892 = vadd.f32 %v1764, %v1829
        %v1893 = vadd.f32 %v1765, %v1841
        %v1894 = vadd.f32 %v1766, %v1853
        %v1895 = vadd.f32 %v1767, %v1865
        %v1896 = vadd.f32 %v1768, %v1877
        %v1897 = vadd.f32 %v1769, %v1889
        %v1898 = vlog2.pop %v1890
        %v1899 = vmul.f32 %v1898, 0.6931472
        %v1900 = vlog2.pop %v1891
        %v1901 = vmul.f32 %v1900, 0.6931472
        %v1902 = vlog2.pop %v1892
        %v1903 = vmul.f32 %v1902, 0.6931472
        %v1904 = vlog2.pop %v1893
        %v1905 = vmul.f32 %v1904, 0.6931472
        %v1906 = vlog2.pop %v1894
        %v1907 = vmul.f32 %v1906, 0.6931472
        %v1908 = vlog2.pop %v1895
        %v1909 = vmul.f32 %v1908, 0.6931472
        %v1910 = vlog2.pop %v1896
        %v1911 = vmul.f32 %v1910, 0.6931472
        %v1912 = vlog2.pop %v1897
        %v1913 = vmul.f32 %v1912, 0.6931472
        %v1914 = vmul.f32 %v1899, %v1667
        %v1915 = vmul.f32 %v1901, %v1677
        %v1916 = vmul.f32 %v1903, %v1687
        %v1917 = vmul.f32 %v1905, %v1697
        %v1918 = vmul.f32 %v1907, %v1707
        %v1919 = vmul.f32 %v1909, %v1717
        %v1920 = vmul.f32 %v1911, %v1727
        %v1921 = vmul.f32 %v1913, %v1737
        %v1922 = vmul.f32 %v1914, %v1642
        %v1923 = vmul.f32 %v1915, %v1643
        %v1924 = vmul.f32 %v1916, %v1644
        %v1925 = vmul.f32 %v1917, %v1645
        %v1926 = vmul.f32 %v1918, %v1646
        %v1927 = vmul.f32 %v1919, %v1647
        %v1928 = vmul.f32 %v1920, %v1648
        %v1929 = vmul.f32 %v1921, %v1649
        %v1930 = vsel %vm212, 0.0, %v1922
        %v1931 = vsel %vm212, 0.0, %v1923
        %v1932 = vsel %vm212, 0.0, %v1924
        %v1933 = vsel %vm212, 0.0, %v1925
        %v1934 = vsel %vm212, 0.0, %v1926
        %v1935 = vsel %vm212, 0.0, %v1927
        %v1936 = vsel %vm212, 0.0, %v1928
        %v1937 = vsel %vm212, 0.0, %v1929
        %v1938 = vpack.c.bf16 %v1930, %v1930
        %v1939 = vpack.c.bf16 %v1931, %v1931
        %v1940 = vpack.c.bf16 %v1932, %v1932
        %v1941 = vpack.c.bf16 %v1933, %v1933
        %v1942 = vpack.c.bf16 %v1934, %v1934
        %v1943 = vpack.c.bf16 %v1935, %v1935
        %v1944 = vpack.c.bf16 %v1936, %v1936
        %v1945 = vpack.c.bf16 %v1937, %v1937
        %1946 = vst [vmem:[%s207] sm:$0xf] %v1938
        %1947 = vst [vmem:[%s207 + $0x4] sm:$0xf] %v1939
        %1948 = vst [vmem:[%s207 + $0x8] sm:$0xf] %v1940
        %1949 = vst [vmem:[%s207 + $0xc] sm:$0xf] %v1941
        %1950 = vst [vmem:[%s207 + $0x10] sm:$0xf] %v1942
        %1951 = vst [vmem:[%s207 + $0x14] sm:$0xf] %v1943
        %1952 = vst [vmem:[%s207 + $0x18] sm:$0xf] %v1944
        %1953 = vst [vmem:[%s207 + $0x1c] sm:$0xf] %v1945
        %s1954 = sand.u32 %s97, 1
        %s1955 = scalar_lea.sflag [#allocation4], %s1954
        %s1956 = sand.u32 %s97, 1
        %s1957 = smul.addr %s1956, 32
        %s1958 = scalar_lea.vmem [#allocation7], %s1957
        // Predicated region
        $region41: #{tpu_custom_call.1} parent=31 // pred_check
          %p1959 = pneg %p107
        $region42: #{tpu_custom_call.1} parent=31 // pred_check_branch
          %1961 = sbr.rel (%p1959) target = $region44
        $region43: #{tpu_custom_call.1} parent=31 // pred_region
          %s1962 = smul.u32 8, %s21
          %1964 = vsyncadd %s1955, 0
          %s1965 = smul.addr %s1962, 4
          %s1966 = scalar_lea.hbm %s3, %s1965
          %s1967 = sshll.u32 %s1958, 4
          %s1968 = int_to_ptr.vmem [resolvable:$true] %s1967
          %s1969 = sshll.u32 %s1966, 4
          %s1970 = int_to_ptr.hbm [resolvable:$true] %s1969
          %1975 = dma.vmem_to_hbm [thread:$0]  %s1968, 512, %s1970, %s1955, 64, 64, 4
        $region44: #{tpu_custom_call.1} parent=31 // pred_fallthru
          _
      $region32: #{tpu_custom_call.1} parent=5 // pred_fallthru
        _
      %p1976 = scmp.le.s32.totalorder 2, %s16
      // Predicated region
      $region45: #{tpu_custom_call.1} parent=5 // pred_check
        %p1977 = pneg %p1976
      $region46: #{tpu_custom_call.1} parent=5 // pred_check_branch
        %1979 = sbr.rel (%p1977) target = $region48
      $region47: #{tpu_custom_call.1} parent=5 // pred_region
        %s1980 = ssub.s32 %s16, 2
        // Predicated region
        $region49: #{tpu_custom_call.1} parent=47 // pred_check
          %p1981 = pneg %p113
        $region50: #{tpu_custom_call.1} parent=47 // pred_check_branch
          %1983 = sbr.rel (%p1981) target = $region52
        $region51: #{tpu_custom_call.1} parent=47 // pred_region
          %s1984 = sand.u32 %s98, 1
          %s1985 = scalar_lea.sflag [#allocation4], %s1984
          %s1986 = sand.u32 %s98, 1
          %s1987 = smul.addr %s1986, 32
          %s1988 = scalar_lea.vmem [#allocation7], %s1987
          %1990 = dma.done %s1985, 512
        $region52: #{tpu_custom_call.1} parent=47 // pred_fallthru
          _
      $region48: #{tpu_custom_call.1} parent=5 // pred_fallthru
        _
    $region6: #{tpu_custom_call.1} parent=1 // loop_footer
      %s20 = sadd.s32 1, %s16
    $region7: #{tpu_custom_call.1} parent=1 // loop_footer_branch
      %15 = sbr.rel target = $region3
    $region8: #{tpu_custom_call.1} parent=1 // loop_exit
      _
    %1991 = vsyncpa [#allocation3], 1
    %s1992 = scalar_lea.sflag [#allocation3], 1
    %1993 = vsyncpa %s1992, 1
    %1994 = vsyncpa [#allocation6], 1
    %1995 = vsyncpa [#allocation4], 1
    %s1996 = scalar_lea.sflag [#allocation4], 1
    %1997 = vsyncpa %s1996, 1

</llo_original>
